<compile_context>
chip_gen: v7x
topology: tpu7x:2x2x1
jax: 0.10.0
libtpu: 0.0.40
codegen_flags: <defaults>
</compile_context>

<pallas_src>
import math
import functools

import jax
import jax.numpy as jnp
from jax.experimental import pallas as pl
from jax.experimental.pallas import tpu as pltpu


# ----------------------------------------------------------------------------
# small helpers
# ----------------------------------------------------------------------------
def _layernorm_rows(x, g, b, eps=1e-5):
    mean = jnp.mean(x, axis=-1, keepdims=True)
    xc = x - mean
    var = jnp.mean(xc * xc, axis=-1, keepdims=True)
    return xc * jax.lax.rsqrt(var + eps) * g + b


def _gelu_tanh(x):
    # tanh-approx GELU (EUP tanh); see TODO above re: exact-erf nn.GELU.
    c = math.sqrt(2.0 / math.pi)
    return 0.5 * x * (1.0 + jnp.tanh(c * (x + 0.044715 * x * x * x)))


def _pick_tile(n, preferred):
    """Largest tile <= preferred that divides n and is a multiple of 8 (else full n)."""
    if n <= preferred:
        return n
    for t in (preferred, 512, 256, 128, 64, 32, 16, 8):
        if t <= preferred and n % t == 0:
            return t
    return n


def _sort_rows_with_indices(x):
    """Ascending sort along the last axis, returning (values, original indices)."""
    idx = jax.lax.broadcasted_iota(jnp.int32, x.shape, x.ndim - 1)
    return jax.lax.sort((x, idx), dimension=x.ndim - 1, num_keys=1)


# ----------------------------------------------------------------------------
# kernel 1: fused q/k/v pointwise projection  (x @ [wq|wk|wv3] + [bq|bk|bv3])
# ----------------------------------------------------------------------------
def _qkv_kernel(x_ref, w_ref, b_ref, o_ref):
    o_ref[...] = (jnp.dot(x_ref[...], w_ref[...],
                          preferred_element_type=jnp.float32) + b_ref[...]
                  ).astype(o_ref.dtype)


def qkv_projection(x2d, wqkv, bqkv, *, tile_m=512):
    M, D = x2d.shape
    C = wqkv.shape[1]
    tm = _pick_tile(M, tile_m)
    return pl.pallas_call(
        _qkv_kernel,
        out_shape=jax.ShapeDtypeStruct((M, C), jnp.float32),
        grid=(M // tm,),
        in_specs=[pl.BlockSpec((tm, D), lambda i: (i, 0)),
                  pl.BlockSpec((D, C), lambda i: (0, 0)),
                  pl.BlockSpec((1, C), lambda i: (0, 0))],
        out_specs=pl.BlockSpec((tm, C), lambda i: (i, 0)),
        compiler_params=pltpu.CompilerParams(dimension_semantics=("parallel",)),
    )(x2d, wqkv, bqkv)


# ----------------------------------------------------------------------------
# kernel 2: Cucconi-score attention + fused post-attention tail
#   (attn @ v3 [+bo] -> residual -> LN1 -> conv1 -> GELU -> conv2 -> residual -> LN2)
#   Inputs are per-row ASCENDING-sorted, log-softmax-shifted query projections
#   (+ argsort indices) and DESCENDING-sorted shifted key projections (+ indices).
# ----------------------------------------------------------------------------
def _attn_post_kernel(qs_ref, qi_ref, ks_ref, ki_ref, v_ref, x_ref,
                      bo_ref, g1_ref, be1_ref, w1_ref, b1_ref,
                      w2_ref, b2_ref, g2_ref, be2_ref, o_ref,
                      *, dim, rio, sup, eps):
    f32 = jnp.float32
    D = dim

    q = qs_ref[0]                      # (L, D)  ascending, log-softmax shifted
    k = ks_ref[0]                      # (TI, D) descending, log-softmax shifted
    qi = qi_ref[0]                     # (L, D)  original 0-based positions (f32)
    ki = ki_ref[0]                     # (TI, D)

    # merge test: p-th smallest q value of row j is among the D smallest pooled
    # values of pool(i, j) iff it is < the p-th largest k value of row i.
    ind = (q[None, :, :] < k[:, None, :]).astype(f32)               # (TI, L, D)

    # squared 1-based positions inside the concatenated [q | k] pool
    wq_sum = (qi + 1.0) ** 2                      # query slot p  -> (p+1)^2
    wq_rev = (2.0 * D - qi) ** 2                  # (2D+1 - (p+1))^2
    wk_sum = (D + ki + 1.0) ** 2                  # key slot m    -> (D+m+1)^2
    wk_rev = (D - ki) ** 2                        # (2D+1 - (D+m+1))^2

    def s2(n):                                    # sum of squares 1..n
        return n * (n + 1) * (2 * n + 1) / 6.0
    c_krev = s2(D)                                # Σ all key rev-weights
    c_ksum = s2(2 * D) - s2(D)                    # Σ all key sum-weights

    # selected keys are the pairwise complement of selected queries, so
    #   sum_sq = Σ_sel_q wq_sum + (Σ_all_k wk_sum - Σ_{complement} wk_sum)
    sum_sq = c_ksum + jnp.sum((wq_sum[None, :, :] - wk_sum[:, None, :]) * ind,
                              axis=-1)                               # (TI, L)
    rev_sq = c_krev + jnp.sum((wq_rev[None, :, :] - wk_rev[:, None, :]) * ind,
                              axis=-1)

    mu = D * (2 * D + 1) * (4 * D + 1)
    sigma = math.sqrt(D * D * (2 * D + 1) * (4 * D + 1) * (16 * D + 11) / 5.0)
    u = (6.0 * sum_sq - mu) / sigma
    vv = (6.0 * rev_sq - mu) / sigma
    c = (u * u + vv * vv - 2.0 * rio * u * vv) * (1.0 / (2.0 * (1.0 - rio * rio)))
    c = jnp.minimum(c, jnp.float32(sup))

    # softmax(-log(c + eps)) == (1/(c+eps)) / Σ_j (1/(c+eps))
    r = pl.reciprocal(c + jnp.float32(eps), approx=True)             # (TI, L)
    attn = r / jnp.sum(r, axis=-1, keepdims=True)

    # attention output is already output-projected (Wo folded into v3); add bo.
    new_x = jnp.dot(attn, v_ref[0], preferred_element_type=f32) + bo_ref[...]

    # residual + LN1 + FFN(GELU) + residual + LN2 (dropouts are identity)
    xn = _layernorm_rows(x_ref[0] + new_x, g1_ref[...], be1_ref[...])
    h = _gelu_tanh(jnp.dot(xn, w1_ref[...], preferred_element_type=f32)
                   + b1_ref[...])
    y = xn + jnp.dot(h, w2_ref[...], preferred_element_type=f32) + b2_ref[...]
    o_ref[0] = _layernorm_rows(y, g2_ref[...], be2_ref[...]).astype(o_ref.dtype)


def vrca_attention_post(qs, qi, ks, ki, v3, x, params, *, rio, sup, eps,
                        tile_i=32):
    B, L, D = qs.shape
    H = params["w1"].shape[1]
    ti = _pick_tile(L, tile_i)
    kern = functools.partial(_attn_post_kernel, dim=D, rio=float(rio),
                             sup=float(sup), eps=float(eps))
    full3 = lambda b, it: (b, 0, 0)
    tile3 = lambda b, it: (b, it, 0)
    rep2 = lambda b, it: (0, 0)
    return pl.pallas_call(
        kern,
        out_shape=jax.ShapeDtypeStruct((B, L, D), jnp.float32),
        grid=(B, L // ti),
        in_specs=[pl.BlockSpec((1, L, D), full3),    # q sorted ascending (shifted)
                  pl.BlockSpec((1, L, D), full3),    # q argsort indices (f32)
                  pl.BlockSpec((1, ti, D), tile3),   # k sorted descending (shifted)
                  pl.BlockSpec((1, ti, D), tile3),   # k indices (f32)
                  pl.BlockSpec((1, L, D), full3),    # v3 (double value proj @ Wo)
                  pl.BlockSpec((1, ti, D), tile3),   # residual x tile
                  pl.BlockSpec((1, D), rep2),        # bo
                  pl.BlockSpec((1, D), rep2),        # gamma1
                  pl.BlockSpec((1, D), rep2),        # beta1
                  pl.BlockSpec((D, H), rep2),        # w1
                  pl.BlockSpec((1, H), rep2),        # b1
                  pl.BlockSpec((H, D), rep2),        # w2
                  pl.BlockSpec((1, D), rep2),        # b2
                  pl.BlockSpec((1, D), rep2),        # gamma2
                  pl.BlockSpec((1, D), rep2)],       # beta2
        out_specs=pl.BlockSpec((1, ti, D), tile3),
        compiler_params=pltpu.CompilerParams(
            dimension_semantics=("parallel", "parallel")),
    )(qs, qi, ks, ki, v3, x,
      params["bo"], params["g1"], params["beta1"],
      params["w1"], params["b1"], params["w2"], params["b2"],
      params["g2"], params["beta2"])


# ----------------------------------------------------------------------------
# full VRCA forward
# ----------------------------------------------------------------------------
def vrca_forward(x, params, *, alpha=0.05, eps=1e-6):
    B, L, D = x.shape
    rio = 2 * (4 * D ** 2 - 4) / ((D * 4 + 1) * (D * 16 + 11)) - 1
    sup = (math.sqrt(-8 * math.log(alpha)) / 2) ** 2 / (1 - rio)

    x2 = x.reshape(B * L, D)

    # fold: value projected twice, then output projection weight Wo
    # (attn @ v2) @ Wo == attn @ (v2 @ Wo); bo is added inside kernel 2.
    wv2 = params["wv"] @ params["wv"]
    bv2 = params["bv"] @ params["wv"] + params["bv"]
    wv3 = wv2 @ params["wo"]
    bv3 = bv2 @ params["wo"]
    wqkv = jnp.concatenate([params["wq"], params["wk"], wv3], axis=1)   # (D, 3D)
    bqkv = jnp.concatenate([params["bq"], params["bk"], bv3], axis=1)   # (1, 3D)

    qkv = qkv_projection(x2, wqkv, bqkv)                                # (B*L, 3D)
    qp = qkv[:, :D].reshape(B, L, D)
    kp = qkv[:, D:2 * D].reshape(B, L, D)
    v3 = qkv[:, 2 * D:].reshape(B, L, D)

    # softmax is strictly monotone per row, so sorting the log-softmax-shifted
    # projections gives the same per-row order as sorting the softmax values,
    # and the shift makes cross-row comparisons equivalent to comparing the
    # actual softmax values (done here once; fused by XLA with the sort).
    q_sh = qp - jax.nn.logsumexp(qp, axis=-1, keepdims=True)
    k_sh = kp - jax.nn.logsumexp(kp, axis=-1, keepdims=True)

    qs, qi = _sort_rows_with_indices(q_sh)          # ascending queries
    ks_a, ki_a = _sort_rows_with_indices(k_sh)
    ks = ks_a[..., ::-1]                            # descending keys
    ki = ki_a[..., ::-1]

    return vrca_attention_post(qs, qi.astype(jnp.float32),
                               ks, ki.astype(jnp.float32),
                               v3, x, params, rio=rio, sup=sup, eps=eps)


# ----------------------------------------------------------------------------
# deterministic parameter init (PyTorch-style uniform +/- 1/sqrt(fan_in))
# ----------------------------------------------------------------------------
def init_params(key, D):
    ks = jax.random.split(key, 12)

    def w(k, cin, cout):
        bound = 1.0 / math.sqrt(cin)
        return jax.random.uniform(k, (cin, cout), jnp.float32, -bound, bound)

    def b(k, cin, cout):
        bound = 1.0 / math.sqrt(cin)
        return jax.random.uniform(k, (1, cout), jnp.float32, -bound, bound)

    return {
        "wq": w(ks[0], D, D), "bq": b(ks[1], D, D),
        "wk": w(ks[2], D, D), "bk": b(ks[3], D, D),
        "wv": w(ks[4], D, D), "bv": b(ks[5], D, D),
        "wo": w(ks[6], D, D), "bo": b(ks[7], D, D),
        "w1": w(ks[8], D, 4 * D), "b1": b(ks[9], D, 4 * D),
        "w2": w(ks[10], 4 * D, D), "b2": b(ks[11], 4 * D, D),
        "g1": jnp.ones((1, D), jnp.float32), "beta1": jnp.zeros((1, D), jnp.float32),
        "g2": jnp.ones((1, D), jnp.float32), "beta2": jnp.zeros((1, D), jnp.float32),
    }


if __name__ == "__main__":
    B, L, D = 2, 8, 32          # batch, enc_in (sequence length), dim (features)
    key = jax.random.PRNGKey(0)
    kx, kparam = jax.random.split(key)
    x = jax.random.normal(kx, (B, L, D), jnp.float32)
    params = init_params(kparam, D)

    out = jax.jit(vrca_forward)(x, params)
    out = jax.block_until_ready(out)
    assert out.shape == (B, L, D)
    assert bool(jnp.all(jnp.isfinite(out)))
    print("KERNEL_OK")
</pallas_src>

<mosaic_0001>
module attributes {stable_mosaic.version = 11 : i64} {
  func.func @_qkv_kernel(%arg0: i32, %arg1: memref<16x32xf32, #tpu.memory_space<vmem>>, %arg2: memref<32x96xf32, #tpu.memory_space<vmem>>, %arg3: memref<1x96xf32, #tpu.memory_space<vmem>>, %arg4: memref<16x96xf32, #tpu.memory_space<vmem>>) attributes {dimension_semantics = [#tpu.dimension_semantics<parallel>], iteration_bounds = array<i64: 1>, scalar_prefetch = 0 : i64, scratch_operands = 0 : i64, tpu.core_type = #tpu.core_type<tc>, window_params = [{transform_indices = @transform_0, window_bounds = array<i64: 16, 32>}, {pipeline_mode = #tpu.pipeline_mode<synchronous>, transform_indices = @transform_1, window_bounds = array<i64: 32, 96>}, {pipeline_mode = #tpu.pipeline_mode<synchronous>, transform_indices = @transform_2, window_bounds = array<i64: 1, 96>}, {transform_indices = @transform_3, window_bounds = array<i64: 16, 96>}]} {
    %c0 = arith.constant 0 : index
    %c0_0 = arith.constant 0 : index
    %0 = vector.load %arg1[%c0, %c0_0] : memref<16x32xf32, #tpu.memory_space<vmem>>, vector<16x32xf32>
    %c0_1 = arith.constant 0 : index
    %c0_2 = arith.constant 0 : index
    %1 = vector.load %arg2[%c0_1, %c0_2] : memref<32x96xf32, #tpu.memory_space<vmem>>, vector<32x96xf32>
    %cst = arith.constant dense<0.000000e+00> : vector<16x96xf32>
    %2 = tpu.matmul %0, %1, %cst {dimension_numbers = #tpu.dot_dimension_numbers<[1], [0], [0], [1], [0, 0, 1, 1], [], []>} : vector<16x32xf32>, vector<32x96xf32>, vector<16x96xf32> -> vector<16x96xf32>
    %c0_3 = arith.constant 0 : index
    %c0_4 = arith.constant 0 : index
    %3 = vector.load %arg3[%c0_3, %c0_4] : memref<1x96xf32, #tpu.memory_space<vmem>>, vector<1x96xf32>
    %4 = vector.broadcast %3 : vector<1x96xf32> to vector<16x96xf32>
    %5 = arith.addf %2, %4 : vector<16x96xf32>
    %c0_5 = arith.constant 0 : index
    %c0_6 = arith.constant 0 : index
    %6 = vector.load %arg4[%c0_5, %c0_6] : memref<16x96xf32, #tpu.memory_space<vmem>>, vector<16x96xf32>
    tpu.vector_store %arg4[%c0_5, %c0_6], %5 {strides = array<i32>} : memref<16x96xf32, #tpu.memory_space<vmem>>, vector<16x96xf32>,
    return
  }
  func.func @transform_0(%arg0: i32) -> (i32, i32) {
    %c0_i32 = arith.constant 0 : i32
    %c0_i32_0 = arith.constant 0 : i32
    return %arg0, %c0_i32 : i32, i32
  }
  func.func @transform_1(%arg0: i32) -> (i32, i32) {
    %c0_i32 = arith.constant 0 : i32
    %c0_i32_0 = arith.constant 0 : i32
    %c0_i32_1 = arith.constant 0 : i32
    return %c0_i32, %c0_i32_0 : i32, i32
  }
  func.func @transform_2(%arg0: i32) -> (i32, i32) {
    %c0_i32 = arith.constant 0 : i32
    %c0_i32_0 = arith.constant 0 : i32
    %c0_i32_1 = arith.constant 0 : i32
    return %c0_i32, %c0_i32_0 : i32, i32
  }
  func.func @transform_3(%arg0: i32) -> (i32, i32) {
    %c0_i32 = arith.constant 0 : i32
    %c0_i32_0 = arith.constant 0 : i32
    return %arg0, %c0_i32 : i32, i32
  }
}

module attributes {stable_mosaic.version = 11 : i64} {
  func.func @_attn_post_kernel(%arg0: i32, %arg1: i32, %arg2: memref<1x8x32xf32, #tpu.memory_space<vmem>>, %arg3: memref<1x8x32xf32, #tpu.memory_space<vmem>>, %arg4: memref<1x8x32xf32, #tpu.memory_space<vmem>>, %arg5: memref<1x8x32xf32, #tpu.memory_space<vmem>>, %arg6: memref<1x8x32xf32, #tpu.memory_space<vmem>>, %arg7: memref<1x8x32xf32, #tpu.memory_space<vmem>>, %arg8: memref<1x32xf32, #tpu.memory_space<vmem>>, %arg9: memref<1x32xf32, #tpu.memory_space<vmem>>, %arg10: memref<1x32xf32, #tpu.memory_space<vmem>>, %arg11: memref<32x128xf32, #tpu.memory_space<vmem>>, %arg12: memref<1x128xf32, #tpu.memory_space<vmem>>, %arg13: memref<128x32xf32, #tpu.memory_space<vmem>>, %arg14: memref<1x32xf32, #tpu.memory_space<vmem>>, %arg15: memref<1x32xf32, #tpu.memory_space<vmem>>, %arg16: memref<1x32xf32, #tpu.memory_space<vmem>>, %arg17: memref<1x8x32xf32, #tpu.memory_space<vmem>>) attributes {dimension_semantics = [#tpu.dimension_semantics<parallel>, #tpu.dimension_semantics<parallel>], iteration_bounds = array<i64: 2, 1>, scalar_prefetch = 0 : i64, scratch_operands = 0 : i64, tpu.core_type = #tpu.core_type<tc>, window_params = [{transform_indices = @transform_0, window_bounds = array<i64: 1, 8, 32>}, {transform_indices = @transform_1, window_bounds = array<i64: 1, 8, 32>}, {transform_indices = @transform_2, window_bounds = array<i64: 1, 8, 32>}, {transform_indices = @transform_3, window_bounds = array<i64: 1, 8, 32>}, {transform_indices = @transform_4, window_bounds = array<i64: 1, 8, 32>}, {transform_indices = @transform_5, window_bounds = array<i64: 1, 8, 32>}, {pipeline_mode = #tpu.pipeline_mode<synchronous>, transform_indices = @transform_6, window_bounds = array<i64: 1, 32>}, {pipeline_mode = #tpu.pipeline_mode<synchronous>, transform_indices = @transform_7, window_bounds = array<i64: 1, 32>}, {pipeline_mode = #tpu.pipeline_mode<synchronous>, transform_indices = @transform_8, window_bounds = array<i64: 1, 32>}, {pipeline_mode = #tpu.pipeline_mode<synchronous>, transform_indices = @transform_9, window_bounds = array<i64: 32, 128>}, {pipeline_mode = #tpu.pipeline_mode<synchronous>, transform_indices = @transform_10, window_bounds = array<i64: 1, 128>}, {pipeline_mode = #tpu.pipeline_mode<synchronous>, transform_indices = @transform_11, window_bounds = array<i64: 128, 32>}, {pipeline_mode = #tpu.pipeline_mode<synchronous>, transform_indices = @transform_12, window_bounds = array<i64: 1, 32>}, {pipeline_mode = #tpu.pipeline_mode<synchronous>, transform_indices = @transform_13, window_bounds = array<i64: 1, 32>}, {pipeline_mode = #tpu.pipeline_mode<synchronous>, transform_indices = @transform_14, window_bounds = array<i64: 1, 32>}, {transform_indices = @transform_15, window_bounds = array<i64: 1, 8, 32>}]} {
    %c0 = arith.constant 0 : index
    %c0_0 = arith.constant 0 : index
    %c0_1 = arith.constant 0 : index
    %0 = vector.load %arg2[%c0, %c0_0, %c0_1] : memref<1x8x32xf32, #tpu.memory_space<vmem>>, vector<1x8x32xf32>
    %1 = vector.shape_cast %0 : vector<1x8x32xf32> to vector<8x32xf32>
    %c0_2 = arith.constant 0 : index
    %c0_3 = arith.constant 0 : index
    %c0_4 = arith.constant 0 : index
    %2 = vector.load %arg4[%c0_2, %c0_3, %c0_4] : memref<1x8x32xf32, #tpu.memory_space<vmem>>, vector<1x8x32xf32>
    %3 = vector.shape_cast %2 : vector<1x8x32xf32> to vector<8x32xf32>
    %c0_5 = arith.constant 0 : index
    %c0_6 = arith.constant 0 : index
    %c0_7 = arith.constant 0 : index
    %4 = vector.load %arg3[%c0_5, %c0_6, %c0_7] : memref<1x8x32xf32, #tpu.memory_space<vmem>>, vector<1x8x32xf32>
    %5 = vector.shape_cast %4 : vector<1x8x32xf32> to vector<8x32xf32>
    %c0_8 = arith.constant 0 : index
    %c0_9 = arith.constant 0 : index
    %c0_10 = arith.constant 0 : index
    %6 = vector.load %arg5[%c0_8, %c0_9, %c0_10] : memref<1x8x32xf32, #tpu.memory_space<vmem>>, vector<1x8x32xf32>
    %7 = vector.shape_cast %6 : vector<1x8x32xf32> to vector<8x32xf32>
    %8 = vector.shape_cast %1 : vector<8x32xf32> to vector<1x8x32xf32>
    %9 = vector.shape_cast %3 : vector<8x32xf32> to vector<8x1x32xf32>
    %10 = vector.broadcast %8 : vector<1x8x32xf32> to vector<8x8x32xf32>
    %11 = vector.broadcast %9 : vector<8x1x32xf32> to vector<8x8x32xf32>
    %12 = arith.cmpf olt, %10, %11 : vector<8x8x32xf32>
    %13 = arith.extui %12 : vector<8x8x32xi1> to vector<8x8x32xi32>
    %14 = arith.sitofp %13 : vector<8x8x32xi32> to vector<8x8x32xf32>
    %cst = arith.constant 1.000000e+00 : f32
    %15 = vector.broadcast %cst : f32 to vector<8x32xf32>
    %16 = arith.addf %5, %15 : vector<8x32xf32>
    %17 = arith.mulf %16, %16 : vector<8x32xf32>
    %cst_11 = arith.constant 6.400000e+01 : f32
    %18 = vector.broadcast %cst_11 : f32 to vector<8x32xf32>
    %19 = arith.subf %18, %5 : vector<8x32xf32>
    %20 = arith.mulf %19, %19 : vector<8x32xf32>
    %cst_12 = arith.constant 3.200000e+01 : f32
    %21 = vector.broadcast %cst_12 : f32 to vector<8x32xf32>
    %22 = arith.addf %21, %7 : vector<8x32xf32>
    %cst_13 = arith.constant 1.000000e+00 : f32
    %23 = vector.broadcast %cst_13 : f32 to vector<8x32xf32>
    %24 = arith.addf %22, %23 : vector<8x32xf32>
    %25 = arith.mulf %24, %24 : vector<8x32xf32>
    %cst_14 = arith.constant 3.200000e+01 : f32
    %26 = vector.broadcast %cst_14 : f32 to vector<8x32xf32>
    %27 = arith.subf %26, %7 : vector<8x32xf32>
    %28 = arith.mulf %27, %27 : vector<8x32xf32>
    %29 = vector.shape_cast %17 : vector<8x32xf32> to vector<1x8x32xf32>
    %30 = vector.shape_cast %25 : vector<8x32xf32> to vector<8x1x32xf32>
    %31 = vector.broadcast %29 : vector<1x8x32xf32> to vector<8x8x32xf32>
    %32 = vector.broadcast %30 : vector<8x1x32xf32> to vector<8x8x32xf32>
    %33 = arith.subf %31, %32 : vector<8x8x32xf32>
    %34 = arith.mulf %33, %14 : vector<8x8x32xf32>
    %cst_15 = arith.constant dense<0.000000e+00> : vector<8x8xf32>
    %35 = vector.multi_reduction <add>, %34, %cst_15 [2] : vector<8x8x32xf32> to vector<8x8xf32>
    %cst_16 = arith.constant 7.800000e+04 : f32
    %36 = vector.broadcast %cst_16 : f32 to vector<8x8xf32>
    %37 = arith.addf %36, %35 : vector<8x8xf32>
    %38 = vector.shape_cast %20 : vector<8x32xf32> to vector<1x8x32xf32>
    %39 = vector.shape_cast %28 : vector<8x32xf32> to vector<8x1x32xf32>
    %40 = vector.broadcast %38 : vector<1x8x32xf32> to vector<8x8x32xf32>
    %41 = vector.broadcast %39 : vector<8x1x32xf32> to vector<8x8x32xf32>
    %42 = arith.subf %40, %41 : vector<8x8x32xf32>
    %43 = arith.mulf %42, %14 : vector<8x8x32xf32>
    %cst_17 = arith.constant dense<0.000000e+00> : vector<8x8xf32>
    %44 = vector.multi_reduction <add>, %43, %cst_17 [2] : vector<8x8x32xf32> to vector<8x8xf32>
    %cst_18 = arith.constant 1.144000e+04 : f32
    %45 = vector.broadcast %cst_18 : f32 to vector<8x8xf32>
    %46 = arith.addf %45, %44 : vector<8x8xf32>
    %cst_19 = arith.constant 6.000000e+00 : f32
    %47 = vector.broadcast %cst_19 : f32 to vector<8x8xf32>
    %48 = arith.mulf %47, %37 : vector<8x8xf32>
    %cst_20 = arith.constant 2.683200e+05 : f32
    %49 = vector.broadcast %cst_20 : f32 to vector<8x8xf32>
    %50 = arith.subf %48, %49 : vector<8x8xf32>
    %cst_21 = arith.constant 29968.6621 : f32
    %51 = vector.broadcast %cst_21 : f32 to vector<8x8xf32>
    %52 = arith.divf %50, %51 : vector<8x8xf32>
    %cst_22 = arith.constant 6.000000e+00 : f32
    %53 = vector.broadcast %cst_22 : f32 to vector<8x8xf32>
    %54 = arith.mulf %53, %46 : vector<8x8xf32>
    %cst_23 = arith.constant 2.683200e+05 : f32
    %55 = vector.broadcast %cst_23 : f32 to vector<8x8xf32>
    %56 = arith.subf %54, %55 : vector<8x8xf32>
    %cst_24 = arith.constant 29968.6621 : f32
    %57 = vector.broadcast %cst_24 : f32 to vector<8x8xf32>
    %58 = arith.divf %56, %57 : vector<8x8xf32>
    %59 = arith.mulf %52, %52 : vector<8x8xf32>
    %60 = arith.mulf %58, %58 : vector<8x8xf32>
    %61 = arith.addf %59, %60 : vector<8x8xf32>
    %cst_25 = arith.constant -1.75739253 : f32
    %62 = vector.broadcast %cst_25 : f32 to vector<8x8xf32>
    %63 = arith.mulf %62, %52 : vector<8x8xf32>
    %64 = arith.mulf %63, %58 : vector<8x8xf32>
    %65 = arith.subf %61, %64 : vector<8x8xf32>
    %cst_26 = arith.constant 2.19401312 : f32
    %66 = vector.broadcast %cst_26 : f32 to vector<8x8xf32>
    %67 = arith.mulf %65, %66 : vector<8x8xf32>
    %cst_27 = arith.constant 3.18916082 : f32
    %68 = vector.broadcast %cst_27 : f32 to vector<8x8xf32>
    %69 = arith.minimumf %67, %68 : vector<8x8xf32>
    %cst_28 = arith.constant 9.99999997E-7 : f32
    %70 = vector.broadcast %cst_28 : f32 to vector<8x8xf32>
    %71 = arith.addf %69, %70 : vector<8x8xf32>
    %72 = tpu.reciprocal %71 {approx = true} : vector<8x8xf32> -> vector<8x8xf32>
    %cst_29 = arith.constant dense<0.000000e+00> : vector<8xf32>
    %73 = vector.multi_reduction <add>, %72, %cst_29 [1] : vector<8x8xf32> to vector<8xf32>
    %74 = vector.shape_cast %73 : vector<8xf32> to vector<8x1xf32>
    %75 = vector.broadcast %74 : vector<8x1xf32> to vector<8x8xf32>
    %76 = arith.divf %72, %75 : vector<8x8xf32>
    %c0_30 = arith.constant 0 : index
    %c0_31 = arith.constant 0 : index
    %c0_32 = arith.constant 0 : index
    %77 = vector.load %arg6[%c0_30, %c0_31, %c0_32] : memref<1x8x32xf32, #tpu.memory_space<vmem>>, vector<1x8x32xf32>
    %78 = vector.shape_cast %77 : vector<1x8x32xf32> to vector<8x32xf32>
    %cst_33 = arith.constant dense<0.000000e+00> : vector<8x32xf32>
    %79 = tpu.matmul %76, %78, %cst_33 {dimension_numbers = #tpu.dot_dimension_numbers<[1], [0], [0], [1], [0, 0, 1, 1], [], []>} : vector<8x8xf32>, vector<8x32xf32>, vector<8x32xf32> -> vector<8x32xf32>
    %c0_34 = arith.constant 0 : index
    %c0_35 = arith.constant 0 : index
    %80 = vector.load %arg8[%c0_34, %c0_35] : memref<1x32xf32, #tpu.memory_space<vmem>>, vector<1x32xf32>
    %81 = vector.broadcast %80 : vector<1x32xf32> to vector<8x32xf32>
    %82 = arith.addf %79, %81 : vector<8x32xf32>
    %c0_36 = arith.constant 0 : index
    %c0_37 = arith.constant 0 : index
    %c0_38 = arith.constant 0 : index
    %83 = vector.load %arg7[%c0_36, %c0_37, %c0_38] : memref<1x8x32xf32, #tpu.memory_space<vmem>>, vector<1x8x32xf32>
    %84 = vector.shape_cast %83 : vector<1x8x32xf32> to vector<8x32xf32>
    %85 = arith.addf %84, %82 : vector<8x32xf32>
    %c0_39 = arith.constant 0 : index
    %c0_40 = arith.constant 0 : index
    %86 = vector.load %arg9[%c0_39, %c0_40] : memref<1x32xf32, #tpu.memory_space<vmem>>, vector<1x32xf32>
    %c0_41 = arith.constant 0 : index
    %c0_42 = arith.constant 0 : index
    %87 = vector.load %arg10[%c0_41, %c0_42] : memref<1x32xf32, #tpu.memory_space<vmem>>, vector<1x32xf32>
    %cst_43 = arith.constant dense<0.000000e+00> : vector<8xf32>
    %88 = vector.multi_reduction <add>, %85, %cst_43 [1] : vector<8x32xf32> to vector<8xf32>
    %89 = vector.shape_cast %88 : vector<8xf32> to vector<8x1xf32>
    %cst_44 = arith.constant 3.200000e+01 : f32
    %90 = vector.broadcast %cst_44 : f32 to vector<8x1xf32>
    %91 = arith.divf %89, %90 : vector<8x1xf32>
    %92 = vector.broadcast %91 : vector<8x1xf32> to vector<8x32xf32>
    %93 = arith.subf %85, %92 : vector<8x32xf32>
    %94 = arith.mulf %93, %93 : vector<8x32xf32>
    %cst_45 = arith.constant dense<0.000000e+00> : vector<8xf32>
    %95 = vector.multi_reduction <add>, %94, %cst_45 [1] : vector<8x32xf32> to vector<8xf32>
    %96 = vector.shape_cast %95 : vector<8xf32> to vector<8x1xf32>
    %cst_46 = arith.constant 3.200000e+01 : f32
    %97 = vector.broadcast %cst_46 : f32 to vector<8x1xf32>
    %98 = arith.divf %96, %97 : vector<8x1xf32>
    %cst_47 = arith.constant 9.99999974E-6 : f32
    %99 = vector.broadcast %cst_47 : f32 to vector<8x1xf32>
    %100 = arith.addf %98, %99 : vector<8x1xf32>
    %101 = math.rsqrt %100 : vector<8x1xf32>
    %102 = vector.broadcast %101 : vector<8x1xf32> to vector<8x32xf32>
    %103 = arith.mulf %93, %102 : vector<8x32xf32>
    %104 = vector.broadcast %86 : vector<1x32xf32> to vector<8x32xf32>
    %105 = arith.mulf %103, %104 : vector<8x32xf32>
    %106 = vector.broadcast %87 : vector<1x32xf32> to vector<8x32xf32>
    %107 = arith.addf %105, %106 : vector<8x32xf32>
    %c0_48 = arith.constant 0 : index
    %c0_49 = arith.constant 0 : index
    %108 = vector.load %arg11[%c0_48, %c0_49] : memref<32x128xf32, #tpu.memory_space<vmem>>, vector<32x128xf32>
    %cst_50 = arith.constant dense<0.000000e+00> : vector<8x128xf32>
    %109 = tpu.matmul %107, %108, %cst_50 {dimension_numbers = #tpu.dot_dimension_numbers<[1], [0], [0], [1], [0, 0, 1, 1], [], []>} : vector<8x32xf32>, vector<32x128xf32>, vector<8x128xf32> -> vector<8x128xf32>
    %c0_51 = arith.constant 0 : index
    %c0_52 = arith.constant 0 : index
    %110 = vector.load %arg12[%c0_51, %c0_52] : memref<1x128xf32, #tpu.memory_space<vmem>>, vector<1x128xf32>
    %111 = vector.broadcast %110 : vector<1x128xf32> to vector<8x128xf32>
    %112 = arith.addf %109, %111 : vector<8x128xf32>
    %cst_53 = arith.constant 5.000000e-01 : f32
    %113 = vector.broadcast %cst_53 : f32 to vector<8x128xf32>
    %114 = arith.mulf %113, %112 : vector<8x128xf32>
    %cst_54 = arith.constant 4.471500e-02 : f32
    %115 = vector.broadcast %cst_54 : f32 to vector<8x128xf32>
    %116 = arith.mulf %115, %112 : vector<8x128xf32>
    %117 = arith.mulf %116, %112 : vector<8x128xf32>
    %118 = arith.mulf %117, %112 : vector<8x128xf32>
    %119 = arith.addf %112, %118 : vector<8x128xf32>
    %cst_55 = arith.constant 0.797884583 : f32
    %120 = vector.broadcast %cst_55 : f32 to vector<8x128xf32>
    %121 = arith.mulf %120, %119 : vector<8x128xf32>
    %122 = math.tanh %121 : vector<8x128xf32>
    %cst_56 = arith.constant 1.000000e+00 : f32
    %123 = vector.broadcast %cst_56 : f32 to vector<8x128xf32>
    %124 = arith.addf %123, %122 : vector<8x128xf32>
    %125 = arith.mulf %114, %124 : vector<8x128xf32>
    %c0_57 = arith.constant 0 : index
    %c0_58 = arith.constant 0 : index
    %126 = vector.load %arg13[%c0_57, %c0_58] : memref<128x32xf32, #tpu.memory_space<vmem>>, vector<128x32xf32>
    %cst_59 = arith.constant dense<0.000000e+00> : vector<8x32xf32>
    %127 = tpu.matmul %125, %126, %cst_59 {dimension_numbers = #tpu.dot_dimension_numbers<[1], [0], [0], [1], [0, 0, 1, 1], [], []>} : vector<8x128xf32>, vector<128x32xf32>, vector<8x32xf32> -> vector<8x32xf32>
    %128 = arith.addf %107, %127 : vector<8x32xf32>
    %c0_60 = arith.constant 0 : index
    %c0_61 = arith.constant 0 : index
    %129 = vector.load %arg14[%c0_60, %c0_61] : memref<1x32xf32, #tpu.memory_space<vmem>>, vector<1x32xf32>
    %130 = vector.broadcast %129 : vector<1x32xf32> to vector<8x32xf32>
    %131 = arith.addf %128, %130 : vector<8x32xf32>
    %c0_62 = arith.constant 0 : index
    %c0_63 = arith.constant 0 : index
    %132 = vector.load %arg15[%c0_62, %c0_63] : memref<1x32xf32, #tpu.memory_space<vmem>>, vector<1x32xf32>
    %c0_64 = arith.constant 0 : index
    %c0_65 = arith.constant 0 : index
    %133 = vector.load %arg16[%c0_64, %c0_65] : memref<1x32xf32, #tpu.memory_space<vmem>>, vector<1x32xf32>
    %cst_66 = arith.constant dense<0.000000e+00> : vector<8xf32>
    %134 = vector.multi_reduction <add>, %131, %cst_66 [1] : vector<8x32xf32> to vector<8xf32>
    %135 = vector.shape_cast %134 : vector<8xf32> to vector<8x1xf32>
    %cst_67 = arith.constant 3.200000e+01 : f32
    %136 = vector.broadcast %cst_67 : f32 to vector<8x1xf32>
    %137 = arith.divf %135, %136 : vector<8x1xf32>
    %138 = vector.broadcast %137 : vector<8x1xf32> to vector<8x32xf32>
    %139 = arith.subf %131, %138 : vector<8x32xf32>
    %140 = arith.mulf %139, %139 : vector<8x32xf32>
    %cst_68 = arith.constant dense<0.000000e+00> : vector<8xf32>
    %141 = vector.multi_reduction <add>, %140, %cst_68 [1] : vector<8x32xf32> to vector<8xf32>
    %142 = vector.shape_cast %141 : vector<8xf32> to vector<8x1xf32>
    %cst_69 = arith.constant 3.200000e+01 : f32
    %143 = vector.broadcast %cst_69 : f32 to vector<8x1xf32>
    %144 = arith.divf %142, %143 : vector<8x1xf32>
    %cst_70 = arith.constant 9.99999974E-6 : f32
    %145 = vector.broadcast %cst_70 : f32 to vector<8x1xf32>
    %146 = arith.addf %144, %145 : vector<8x1xf32>
    %147 = math.rsqrt %146 : vector<8x1xf32>
    %148 = vector.broadcast %147 : vector<8x1xf32> to vector<8x32xf32>
    %149 = arith.mulf %139, %148 : vector<8x32xf32>
    %150 = vector.broadcast %132 : vector<1x32xf32> to vector<8x32xf32>
    %151 = arith.mulf %149, %150 : vector<8x32xf32>
    %152 = vector.broadcast %133 : vector<1x32xf32> to vector<8x32xf32>
    %153 = arith.addf %151, %152 : vector<8x32xf32>
    %c0_71 = arith.constant 0 : index
    %c0_72 = arith.constant 0 : index
    %c0_73 = arith.constant 0 : index
    %154 = vector.load %arg17[%c0_71, %c0_72, %c0_73] : memref<1x8x32xf32, #tpu.memory_space<vmem>>, vector<1x8x32xf32>
    %155 = vector.shape_cast %154 : vector<1x8x32xf32> to vector<8x32xf32>
    %156 = vector.shape_cast %153 : vector<8x32xf32> to vector<1x8x32xf32>
    tpu.vector_store %arg17[%c0_71, %c0_72, %c0_73], %156 {strides = array<i32>} : memref<1x8x32xf32, #tpu.memory_space<vmem>>, vector<1x8x32xf32>,
    return
  }
  func.func @transform_0(%arg0: i32, %arg1: i32) -> (i32, i32, i32) {
    %c0_i32 = arith.constant 0 : i32
    %c0_i32_0 = arith.constant 0 : i32
    %c0_i32_1 = arith.constant 0 : i32
    return %arg0, %c0_i32, %c0_i32_0 : i32, i32, i32
  }
  func.func @transform_1(%arg0: i32, %arg1: i32) -> (i32, i32, i32) {
    %c0_i32 = arith.constant 0 : i32
    %c0_i32_0 = arith.constant 0 : i32
    %c0_i32_1 = arith.constant 0 : i32
    return %arg0, %c0_i32, %c0_i32_0 : i32, i32, i32
  }
  func.func @transform_2(%arg0: i32, %arg1: i32) -> (i32, i32, i32) {
    %c0_i32 = arith.constant 0 : i32
    %c0_i32_0 = arith.constant 0 : i32
    return %arg0, %arg1, %c0_i32 : i32, i32, i32
  }
  func.func @transform_3(%arg0: i32, %arg1: i32) -> (i32, i32, i32) {
    %c0_i32 = arith.constant 0 : i32
    %c0_i32_0 = arith.constant 0 : i32
    return %arg0, %arg1, %c0_i32 : i32, i32, i32
  }
  func.func @transform_4(%arg0: i32, %arg1: i32) -> (i32, i32, i32) {
    %c0_i32 = arith.constant 0 : i32
    %c0_i32_0 = arith.constant 0 : i32
    %c0_i32_1 = arith.constant 0 : i32
    return %arg0, %c0_i32, %c0_i32_0 : i32, i32, i32
  }
  func.func @transform_5(%arg0: i32, %arg1: i32) -> (i32, i32, i32) {
    %c0_i32 = arith.constant 0 : i32
    %c0_i32_0 = arith.constant 0 : i32
    return %arg0, %arg1, %c0_i32 : i32, i32, i32
  }
  func.func @transform_6(%arg0: i32, %arg1: i32) -> (i32, i32) {
    %c0_i32 = arith.constant 0 : i32
    %c0_i32_0 = arith.constant 0 : i32
    %c0_i32_1 = arith.constant 0 : i32
    return %c0_i32, %c0_i32_0 : i32, i32
  }
  func.func @transform_7(%arg0: i32, %arg1: i32) -> (i32, i32) {
    %c0_i32 = arith.constant 0 : i32
    %c0_i32_0 = arith.constant 0 : i32
    %c0_i32_1 = arith.constant 0 : i32
    return %c0_i32, %c0_i32_0 : i32, i32
  }
  func.func @transform_8(%arg0: i32, %arg1: i32) -> (i32, i32) {
    %c0_i32 = arith.constant 0 : i32
    %c0_i32_0 = arith.constant 0 : i32
    %c0_i32_1 = arith.constant 0 : i32
    return %c0_i32, %c0_i32_0 : i32, i32
  }
  func.func @transform_9(%arg0: i32, %arg1: i32) -> (i32, i32) {
    %c0_i32 = arith.constant 0 : i32
    %c0_i32_0 = arith.constant 0 : i32
    %c0_i32_1 = arith.constant 0 : i32
    return %c0_i32, %c0_i32_0 : i32, i32
  }
  func.func @transform_10(%arg0: i32, %arg1: i32) -> (i32, i32) {
    %c0_i32 = arith.constant 0 : i32
    %c0_i32_0 = arith.constant 0 : i32
    %c0_i32_1 = arith.constant 0 : i32
    return %c0_i32, %c0_i32_0 : i32, i32
  }
  func.func @transform_11(%arg0: i32, %arg1: i32) -> (i32, i32) {
    %c0_i32 = arith.constant 0 : i32
    %c0_i32_0 = arith.constant 0 : i32
    %c0_i32_1 = arith.constant 0 : i32
    return %c0_i32, %c0_i32_0 : i32, i32
  }
  func.func @transform_12(%arg0: i32, %arg1: i32) -> (i32, i32) {
    %c0_i32 = arith.constant 0 : i32
    %c0_i32_0 = arith.constant 0 : i32
    %c0_i32_1 = arith.constant 0 : i32
    return %c0_i32, %c0_i32_0 : i32, i32
  }
  func.func @transform_13(%arg0: i32, %arg1: i32) -> (i32, i32) {
    %c0_i32 = arith.constant 0 : i32
    %c0_i32_0 = arith.constant 0 : i32
    %c0_i32_1 = arith.constant 0 : i32
    return %c0_i32, %c0_i32_0 : i32, i32
  }
  func.func @transform_14(%arg0: i32, %arg1: i32) -> (i32, i32) {
    %c0_i32 = arith.constant 0 : i32
    %c0_i32_0 = arith.constant 0 : i32
    %c0_i32_1 = arith.constant 0 : i32
    return %c0_i32, %c0_i32_0 : i32, i32
  }
  func.func @transform_15(%arg0: i32, %arg1: i32) -> (i32, i32, i32) {
    %c0_i32 = arith.constant 0 : i32
    %c0_i32_0 = arith.constant 0 : i32
    return %arg0, %arg1, %c0_i32 : i32, i32, i32
  }
}

</mosaic_0001>

<llo_original>
// kernel: vrca_forward.2
$region0: #{vrca_forward.2}
  #allocation0 [shape = 'u32[]', space=smem, size = 0x4, offset = 0x4, fixed_abs, tag = 'smem constant byte address 0x4 - core index']
  #allocation1 [shape = 'u32[144,128]{1,0:T(1,128)}', space=vmem, size = 0x12000, scoped, tag = 'internal scratch']
  %s0 = inlined_call_operand.vmem [shape: f32[16,32], index: 0, kind: input, shape index: {}]
  %s1 = inlined_call_operand.vmem [shape: f32[32,96], index: 1, kind: input, shape index: {}]
  %s2 = inlined_call_operand.vmem [shape: f32[1,96], index: 2, kind: input, shape index: {}]
  %s3 = inlined_call_operand.vmem [shape: f32[16,96], index: 3, kind: output, shape index: {}]
  %s4 = sld [smem:[#allocation0]]
  $region22: #{vrca_forward.2} parent=0
    _
  %s6 = ssub.s32 1, %s4
  %s7 = scalar_select 0, %s6, %s4
  // Predicated region
  $region2: #{vrca_forward.2} parent=0 // pred_check
    _
  $region3: #{vrca_forward.2} parent=0 // pred_check_branch
    %9 = sbr.rel (0) target = $region5
  $region4: #{vrca_forward.2} parent=0 // pred_region
    _
  $region5: #{vrca_forward.2} parent=0 // pred_fallthru
    _
  // Predicated region
  $region6: #{vrca_forward.2} parent=0 // pred_check
    _
  $region7: #{vrca_forward.2} parent=0 // pred_check_branch
    %11 = sbr.rel (0) target = $region9
  $region8: #{vrca_forward.2} parent=0 // pred_region
    _
  $region9: #{vrca_forward.2} parent=0 // pred_fallthru
    _
  // Predicated region
  $region10: #{vrca_forward.2} parent=0 // pred_check
    _
  $region11: #{vrca_forward.2} parent=0 // pred_check_branch
    %13 = sbr.rel (0) target = $region13
  $region12: #{vrca_forward.2} parent=0 // pred_region
    _
  $region13: #{vrca_forward.2} parent=0 // pred_fallthru
    _
  %v14 = vld [vmem:[%s0] sm:$0xff]
  %v15 = vld [vmem:[%s0 + $0x8] sm:$0xff]
  %v16 = vld [vmem:[%s1] sm:$0xff]
  %v17 = vld [vmem:[%s1 + $0x8] sm:$0xff]
  %v18 = vld [vmem:[%s1 + $0x10] sm:$0xff]
  %v19 = vld [vmem:[%s1 + $0x18] sm:$0xff]
  %v20 = vld [vmem:[%s2] sm:$0x1]
  %v22 = vlaneseq
  %v23 = vshrl.u32 %v22, 7
  %v24 = vsub.s32 0, %v23
  %v25 = vrot.slane %v20, %v24
  %vm27 = vcmask 261120
  %v29 = vsel %vm27, %v14, 0
  %v32 = vsel %vm27, %v15, 0
  %34 = vmatprep.subr.mxu0 0.0
  %35 = vmatpush1.msra.mxu0 %v16
  %36 = vmatprep.subr.mxu0 0.0
  %37 = vmatpush1.msra.mxu0 %v17
  %38 = vmatprep.subr.mxu0 0.0
  %39 = vmatpush1.msra.mxu0 %v18
  %40 = vmatprep.subr.mxu0 0.0
  %41 = vmatpush1.msra.mxu0 %v19
  %42 = vmatprep.subr.mxu0 0.0
  %43 = vmatpush1.msra.mxu0 0.0
  %44 = vmatprep.subr.mxu0 0.0
  %45 = vmatpush1.msra.mxu0 0.0
  %46 = vmatprep.subr.mxu0 0.0
  %47 = vmatpush1.msra.mxu0 0.0
  %48 = vmatprep.subr.mxu0 0.0
  %49 = vmatpush1.msra.mxu0 0.0
  %50 = vmatprep.subr.mxu0 0.0
  %51 = vmatpush1.msra.mxu0 0.0
  %52 = vmatprep.subr.mxu0 0.0
  %53 = vmatpush1.msra.mxu0 0.0
  %54 = vmatprep.subr.mxu0 0.0
  %55 = vmatpush1.msra.mxu0 0.0
  %56 = vmatprep.subr.mxu0 0.0
  %57 = vmatpush1.msra.mxu0 0.0
  %58 = vmatprep.subr.mxu0 0.0
  %59 = vmatpush1.msra.mxu0 0.0
  %60 = vmatprep.subr.mxu0 0.0
  %61 = vmatpush1.msra.mxu0 0.0
  %62 = vmatprep.subr.mxu0 0.0
  %63 = vmatpush1.msra.mxu0 0.0
  %64 = vmatprep.subr.mxu0 0.0
  %65 = vmatpush1.msra.mxu0 0.0
  %66 = vmatprep.subr.mxu0 0.0
  %67 = vmatpush1.msra.mxu0 0.0
  %68 = vmatprep.subr.mxu0 0.0
  %69 = vmatpush1.msra.mxu0 0.0
  %70 = vmatprep.subr.mxu0 0.0
  %71 = vmatpush1.msra.mxu0 0.0
  %72 = vmatprep.subr.mxu0 0.0
  %73 = vmatpush1.msra.mxu0 0.0
  %74 = vmatprep.subr.mxu0 0.0
  %75 = vmatpush1.msra.mxu0 0.0
  %76 = vmatprep.subr.mxu0 0.0
  %77 = vmatpush1.msra.mxu0 0.0
  %78 = vmatprep.subr.mxu0 0.0
  %79 = vmatpush1.msra.mxu0 0.0
  %80 = vmatprep.subr.mxu0 0.0
  %81 = vmatpush1.msra.mxu0 0.0
  %82 = vmatprep.subr.mxu0 0.0
  %83 = vmatpush1.msra.mxu0 0.0
  %84 = vmatprep.subr.mxu0 0.0
  %85 = vmatpush1.msra.mxu0 0.0
  %86 = vmatprep.subr.mxu0 0.0
  %87 = vmatpush1.msra.mxu0 0.0
  %88 = vmatprep.subr.mxu0 0.0
  %89 = vmatpush1.msra.mxu0 0.0
  %90 = vmatprep.subr.mxu0 0.0
  %91 = vmatpush1.msra.mxu0 0.0
  %92 = vmatprep.subr.mxu0 0.0
  %93 = vmatpush1.msra.mxu0 0.0
  %94 = vmatprep.subr.mxu0 0.0
  %95 = vmatpush1.msra.mxu0 0.0
  %96 = vmatprep.subr.mxu0 0.0
  %97 = vmatpush1.msra.mxu0 0.0
  %98 = vmatprep.mubr.f32.mxu0 0.0
  %99 = vmatmul.mubr.f32.gmra.mrb[0].mxu0 %v29
  %v100 = vpop.f32.mrb[0].mxu0
  %v101 = vadd.f32 %v25, %v100
  %v102 = vpop.f32.mrb[0].mxu0
  %103 = vmatprep.mubr.f32.mxu0 0.0
  %104 = vmatmul.mubr.f32.gmra.mrb[0].mxu0 %v32
  %v105 = vpop.f32.mrb[0].mxu0
  %v106 = vadd.f32 %v25, %v105
  %v107 = vpop.f32.mrb[0].mxu0
  %108 = vdwg.mxu0
  %vm109 = vcmask 785408
  %110 = vst.msk [vmem:[%s3] sm:$0xff] %vm109, %v101
  %111 = vst.msk [vmem:[%s3 + $0x8] sm:$0xff] %vm109, %v106
  // Predicated region
  $region14: #{vrca_forward.2} parent=0 // pred_check
    _
  $region15: #{vrca_forward.2} parent=0 // pred_check_branch
    %113 = sbr.rel (0) target = $region17
  $region16: #{vrca_forward.2} parent=0 // pred_region
    _
  $region17: #{vrca_forward.2} parent=0 // pred_fallthru
    _
  // Predicated region
  $region18: #{vrca_forward.2} parent=0 // pred_check
    _
  $region19: #{vrca_forward.2} parent=0 // pred_check_branch
    %115 = sbr.rel (0) target = $region21
  $region20: #{vrca_forward.2} parent=0 // pred_region
    _
  $region21: #{vrca_forward.2} parent=0 // pred_fallthru
    _

// kernel: vrca_forward.3
$region0: #{vrca_forward.3}
  #allocation0 [shape = 'u32[]', space=smem, size = 0x4, offset = 0x4, fixed_abs, tag = 'smem constant byte address 0x4 - core index']
  #allocation1 [shape = 'u32[144,128]{1,0:T(1,128)}', space=vmem, size = 0x12000, scoped, tag = 'internal scratch']
  %s0 = inlined_call_operand.vmem [shape: f32[2,8,32], index: 0, kind: input, shape index: {}]
  %s1 = inlined_call_operand.vmem [shape: f32[2,8,32], index: 1, kind: input, shape index: {}]
  %s2 = inlined_call_operand.vmem [shape: f32[2,8,32], index: 2, kind: input, shape index: {}]
  %s3 = inlined_call_operand.vmem [shape: f32[2,8,32], index: 3, kind: input, shape index: {}]
  %s4 = inlined_call_operand.vmem [shape: f32[2,8,32], index: 4, kind: input, shape index: {}]
  %s5 = inlined_call_operand.vmem [shape: f32[2,8,32], index: 5, kind: input, shape index: {}]
  %s6 = inlined_call_operand.vmem [shape: f32[1,32], index: 6, kind: input, shape index: {}]
  %s7 = inlined_call_operand.vmem [shape: f32[1,32], index: 7, kind: input, shape index: {}]
  %s8 = inlined_call_operand.vmem [shape: f32[1,32], index: 8, kind: input, shape index: {}]
  %s9 = inlined_call_operand.vmem [shape: f32[32,128], index: 9, kind: input, shape index: {}]
  %s10 = inlined_call_operand.vmem [shape: f32[1,128], index: 10, kind: input, shape index: {}]
  %s11 = inlined_call_operand.vmem [shape: f32[128,32], index: 11, kind: input, shape index: {}]
  %s12 = inlined_call_operand.vmem [shape: f32[1,32], index: 12, kind: input, shape index: {}]
  %s13 = inlined_call_operand.vmem [shape: f32[1,32], index: 13, kind: input, shape index: {}]
  %s14 = inlined_call_operand.vmem [shape: f32[1,32], index: 14, kind: input, shape index: {}]
  %s15 = inlined_call_operand.hbm [shape: f32[2,8,32], index: 15, kind: output, shape index: {}]
  %s16 = sld [smem:[#allocation0]]
  $region93: #{vrca_forward.3} parent=0
    _
  %s18 = ssub.s32 1, %s16
  %s19 = scalar_select 0, %s18, %s16
  $region1: #{vrca_forward.3} parent=0
    #allocation2 [shape = 'u8[8192]{0}', space=vmem, size = 0x2000, scoped, tag = 'output window, operand 0']
    #allocation3 [shape = 's32[2]{0}', space=sflag, size = 0x8, scoped, tag = 'scoped memory for vrca_forward.3']
    %20 = vsyncpa [#allocation3], 0
    %s21 = scalar_lea.sflag [#allocation3], 1
    %22 = vsyncpa %s21, 0
    loop: start=0, step=1, limit=4
    $region2: #{vrca_forward.3} parent=1 // loop_pre_header
      _
    $region3: #{vrca_forward.3} parent=1 // loop_header
      %s24 = sphi 0, %s28
      %p25 = scmp.ge.s32.totalorder %s24, 4
      %s31 = sphi 0, %s43
      %s32 = sphi 0, %s39
      %s33 = sphi 0, %s31
      %s34 = sphi 0, %s32
      %s35 = sphi 0, %s33
      %s36 = sphi 0, %s34
      %s46 = sphi 0, %s48
      %s49 = sphi 0, %s46
      %s50 = sphi 0, %s49
      %s66 = sphi 0, %s50
      %s72 = sphi 0, %s74
      %s75 = sphi 0, %s72
      %s76 = sphi 0, %s75
      %s92 = sphi 0, %s76
      %s100 = sphi 0, %s102
      %s103 = sphi 0, %s100
      %s104 = sphi 0, %s103
      %s120 = sphi 0, %s104
      %s128 = sphi 0, %s130
      %s131 = sphi 0, %s128
      %s132 = sphi 0, %s131
      %s148 = sphi 0, %s132
      %s154 = sphi 0, %s156
      %s157 = sphi 0, %s154
      %s158 = sphi 0, %s157
      %s174 = sphi 0, %s158
      %s182 = sphi 0, %s184
      %s185 = sphi 0, %s182
      %s186 = sphi 0, %s185
      %s202 = sphi 0, %s186
      %s206 = sphi 0, %s206
      %s208 = sphi 0, %s206
      %s209 = sphi 0, %s208
      %s223 = sphi 0, %s209
      %s227 = sphi 0, %s227
      %s229 = sphi 0, %s227
      %s230 = sphi 0, %s229
      %s244 = sphi 0, %s230
      %s248 = sphi 0, %s248
      %s250 = sphi 0, %s248
      %s251 = sphi 0, %s250
      %s265 = sphi 0, %s251
      %s269 = sphi 0, %s269
      %s271 = sphi 0, %s269
      %s272 = sphi 0, %s271
      %s286 = sphi 0, %s272
      %s290 = sphi 0, %s290
      %s292 = sphi 0, %s290
      %s293 = sphi 0, %s292
      %s307 = sphi 0, %s293
      %s311 = sphi 0, %s311
      %s313 = sphi 0, %s311
      %s314 = sphi 0, %s313
      %s328 = sphi 0, %s314
      %s332 = sphi 0, %s332
      %s334 = sphi 0, %s332
      %s335 = sphi 0, %s334
      %s349 = sphi 0, %s335
      %s353 = sphi 0, %s353
      %s355 = sphi 0, %s353
      %s356 = sphi 0, %s355
      %s370 = sphi 0, %s356
      %s374 = sphi 0, %s374
      %s376 = sphi 0, %s374
      %s377 = sphi 0, %s376
      %s391 = sphi 0, %s377
      %s399 = sphi 0, %s401
      %s402 = sphi 0, %s399
      %s403 = sphi 0, %s402
      %s419 = sphi 0, %s403
    $region4: #{vrca_forward.3} parent=1 // loop_header_branch
      %27 = sbr.rel (%p25) target = $region8
    $region5: #{vrca_forward.3} parent=1 // loop_body
      %s29 = ssub.s32 %s24, 1
      %s30 = ssub.s32 %s24, 2
      %s37 = sadd.s32 1, %s32
      %p38 = scmp.ge.s32.totalorder %s37, 1
      %s39 = scalar_select %p38, 0, %s37
      %s40 = sadd.s32 1, %s31
      %s41 = scalar_select %p38, %s40, %s31
      %p42 = scmp.ge.s32.totalorder %s41, 2
      %s43 = scalar_select %p42, 0, %s41
      %s44 = ssub.s32 %s31, %s43
      %p45 = scmp.eq.s32.totalorder %s44, 0
      %s47 = sadd.s32 %s46, 1
      %s48 = scalar_select %p45, %s46, %s47
      %p51 = pneg %p45
      %p52 = scmp.eq.s32.totalorder %s24, 1
      %p53 = por %p51, %p52
      %p54 = scmp.ne.s32.totalorder %s46, %s49
      %p55 = scmp.eq.s32.totalorder %s24, 0
      %p56 = por %p54, %p55
      %p57 = scmp.ne.s32.totalorder %s46, %s49
      %p58 = scmp.eq.s32.totalorder %s29, 1
      %p59 = por %p57, %p58
      %p60 = scmp.ne.s32.totalorder %s49, %s50
      %p61 = scmp.eq.s32.totalorder %s29, 0
      %p62 = por %p60, %p61
      %p63 = scmp.ne.s32.totalorder %s49, %s50
      %p64 = scmp.eq.s32.totalorder %s30, 1
      %p65 = por %p63, %p64
      %p67 = scmp.ne.s32.totalorder %s50, %s66
      %p68 = scmp.eq.s32.totalorder %s30, 0
      %p69 = por %p67, %p68
      %s70 = ssub.s32 %s31, %s43
      %p71 = scmp.eq.s32.totalorder %s70, 0
      %s73 = sadd.s32 %s72, 1
      %s74 = scalar_select %p71, %s72, %s73
      %p77 = pneg %p71
      %p78 = scmp.eq.s32.totalorder %s24, 1
      %p79 = por %p77, %p78
      %p80 = scmp.ne.s32.totalorder %s72, %s75
      %p81 = scmp.eq.s32.totalorder %s24, 0
      %p82 = por %p80, %p81
      %p83 = scmp.ne.s32.totalorder %s72, %s75
      %p84 = scmp.eq.s32.totalorder %s29, 1
      %p85 = por %p83, %p84
      %p86 = scmp.ne.s32.totalorder %s75, %s76
      %p87 = scmp.eq.s32.totalorder %s29, 0
      %p88 = por %p86, %p87
      %p89 = scmp.ne.s32.totalorder %s75, %s76
      %p90 = scmp.eq.s32.totalorder %s30, 1
      %p91 = por %p89, %p90
      %p93 = scmp.ne.s32.totalorder %s76, %s92
      %p94 = scmp.eq.s32.totalorder %s30, 0
      %p95 = por %p93, %p94
      %s96 = ssub.s32 %s31, %s43
      %s97 = ssub.s32 %s32, %s39
      %s98 = sor.u32 %s96, %s97
      %p99 = scmp.eq.s32.totalorder %s98, 0
      %s101 = sadd.s32 %s100, 1
      %s102 = scalar_select %p99, %s100, %s101
      %p105 = pneg %p99
      %p106 = scmp.eq.s32.totalorder %s24, 1
      %p107 = por %p105, %p106
      %p108 = scmp.ne.s32.totalorder %s100, %s103
      %p109 = scmp.eq.s32.totalorder %s24, 0
      %p110 = por %p108, %p109
      %p111 = scmp.ne.s32.totalorder %s100, %s103
      %p112 = scmp.eq.s32.totalorder %s29, 1
      %p113 = por %p111, %p112
      %p114 = scmp.ne.s32.totalorder %s103, %s104
      %p115 = scmp.eq.s32.totalorder %s29, 0
      %p116 = por %p114, %p115
      %p117 = scmp.ne.s32.totalorder %s103, %s104
      %p118 = scmp.eq.s32.totalorder %s30, 1
      %p119 = por %p117, %p118
      %p121 = scmp.ne.s32.totalorder %s104, %s120
      %p122 = scmp.eq.s32.totalorder %s30, 0
      %p123 = por %p121, %p122
      %s124 = ssub.s32 %s31, %s43
      %s125 = ssub.s32 %s32, %s39
      %s126 = sor.u32 %s124, %s125
      %p127 = scmp.eq.s32.totalorder %s126, 0
      %s129 = sadd.s32 %s128, 1
      %s130 = scalar_select %p127, %s128, %s129
      %p133 = pneg %p127
      %p134 = scmp.eq.s32.totalorder %s24, 1
      %p135 = por %p133, %p134
      %p136 = scmp.ne.s32.totalorder %s128, %s131
      %p137 = scmp.eq.s32.totalorder %s24, 0
      %p138 = por %p136, %p137
      %p139 = scmp.ne.s32.totalorder %s128, %s131
      %p140 = scmp.eq.s32.totalorder %s29, 1
      %p141 = por %p139, %p140
      %p142 = scmp.ne.s32.totalorder %s131, %s132
      %p143 = scmp.eq.s32.totalorder %s29, 0
      %p144 = por %p142, %p143
      %p145 = scmp.ne.s32.totalorder %s131, %s132
      %p146 = scmp.eq.s32.totalorder %s30, 1
      %p147 = por %p145, %p146
      %p149 = scmp.ne.s32.totalorder %s132, %s148
      %p150 = scmp.eq.s32.totalorder %s30, 0
      %p151 = por %p149, %p150
      %s152 = ssub.s32 %s31, %s43
      %p153 = scmp.eq.s32.totalorder %s152, 0
      %s155 = sadd.s32 %s154, 1
      %s156 = scalar_select %p153, %s154, %s155
      %p159 = pneg %p153
      %p160 = scmp.eq.s32.totalorder %s24, 1
      %p161 = por %p159, %p160
      %p162 = scmp.ne.s32.totalorder %s154, %s157
      %p163 = scmp.eq.s32.totalorder %s24, 0
      %p164 = por %p162, %p163
      %p165 = scmp.ne.s32.totalorder %s154, %s157
      %p166 = scmp.eq.s32.totalorder %s29, 1
      %p167 = por %p165, %p166
      %p168 = scmp.ne.s32.totalorder %s157, %s158
      %p169 = scmp.eq.s32.totalorder %s29, 0
      %p170 = por %p168, %p169
      %p171 = scmp.ne.s32.totalorder %s157, %s158
      %p172 = scmp.eq.s32.totalorder %s30, 1
      %p173 = por %p171, %p172
      %p175 = scmp.ne.s32.totalorder %s158, %s174
      %p176 = scmp.eq.s32.totalorder %s30, 0
      %p177 = por %p175, %p176
      %s178 = ssub.s32 %s31, %s43
      %s179 = ssub.s32 %s32, %s39
      %s180 = sor.u32 %s178, %s179
      %p181 = scmp.eq.s32.totalorder %s180, 0
      %s183 = sadd.s32 %s182, 1
      %s184 = scalar_select %p181, %s182, %s183
      %p187 = pneg %p181
      %p188 = scmp.eq.s32.totalorder %s24, 1
      %p189 = por %p187, %p188
      %p190 = scmp.ne.s32.totalorder %s182, %s185
      %p191 = scmp.eq.s32.totalorder %s24, 0
      %p192 = por %p190, %p191
      %p193 = scmp.ne.s32.totalorder %s182, %s185
      %p194 = scmp.eq.s32.totalorder %s29, 1
      %p195 = por %p193, %p194
      %p196 = scmp.ne.s32.totalorder %s185, %s186
      %p197 = scmp.eq.s32.totalorder %s29, 0
      %p198 = por %p196, %p197
      %p199 = scmp.ne.s32.totalorder %s185, %s186
      %p200 = scmp.eq.s32.totalorder %s30, 1
      %p201 = por %p199, %p200
      %p203 = scmp.ne.s32.totalorder %s186, %s202
      %p204 = scmp.eq.s32.totalorder %s30, 0
      %p205 = por %p203, %p204
      %s207 = sadd.s32 %s206, 1
      %p210 = scmp.eq.s32.totalorder %s24, 1
      %p211 = scmp.ne.s32.totalorder %s206, %s208
      %p212 = scmp.eq.s32.totalorder %s24, 0
      %p213 = por %p211, %p212
      %p214 = scmp.ne.s32.totalorder %s206, %s208
      %p215 = scmp.eq.s32.totalorder %s29, 1
      %p216 = por %p214, %p215
      %p217 = scmp.ne.s32.totalorder %s208, %s209
      %p218 = scmp.eq.s32.totalorder %s29, 0
      %p219 = por %p217, %p218
      %p220 = scmp.ne.s32.totalorder %s208, %s209
      %p221 = scmp.eq.s32.totalorder %s30, 1
      %p222 = por %p220, %p221
      %p224 = scmp.ne.s32.totalorder %s209, %s223
      %p225 = scmp.eq.s32.totalorder %s30, 0
      %p226 = por %p224, %p225
      %s228 = sadd.s32 %s227, 1
      %p231 = scmp.eq.s32.totalorder %s24, 1
      %p232 = scmp.ne.s32.totalorder %s227, %s229
      %p233 = scmp.eq.s32.totalorder %s24, 0
      %p234 = por %p232, %p233
      %p235 = scmp.ne.s32.totalorder %s227, %s229
      %p236 = scmp.eq.s32.totalorder %s29, 1
      %p237 = por %p235, %p236
      %p238 = scmp.ne.s32.totalorder %s229, %s230
      %p239 = scmp.eq.s32.totalorder %s29, 0
      %p240 = por %p238, %p239
      %p241 = scmp.ne.s32.totalorder %s229, %s230
      %p242 = scmp.eq.s32.totalorder %s30, 1
      %p243 = por %p241, %p242
      %p245 = scmp.ne.s32.totalorder %s230, %s244
      %p246 = scmp.eq.s32.totalorder %s30, 0
      %p247 = por %p245, %p246
      %s249 = sadd.s32 %s248, 1
      %p252 = scmp.eq.s32.totalorder %s24, 1
      %p253 = scmp.ne.s32.totalorder %s248, %s250
      %p254 = scmp.eq.s32.totalorder %s24, 0
      %p255 = por %p253, %p254
      %p256 = scmp.ne.s32.totalorder %s248, %s250
      %p257 = scmp.eq.s32.totalorder %s29, 1
      %p258 = por %p256, %p257
      %p259 = scmp.ne.s32.totalorder %s250, %s251
      %p260 = scmp.eq.s32.totalorder %s29, 0
      %p261 = por %p259, %p260
      %p262 = scmp.ne.s32.totalorder %s250, %s251
      %p263 = scmp.eq.s32.totalorder %s30, 1
      %p264 = por %p262, %p263
      %p266 = scmp.ne.s32.totalorder %s251, %s265
      %p267 = scmp.eq.s32.totalorder %s30, 0
      %p268 = por %p266, %p267
      %s270 = sadd.s32 %s269, 1
      %p273 = scmp.eq.s32.totalorder %s24, 1
      %p274 = scmp.ne.s32.totalorder %s269, %s271
      %p275 = scmp.eq.s32.totalorder %s24, 0
      %p276 = por %p274, %p275
      %p277 = scmp.ne.s32.totalorder %s269, %s271
      %p278 = scmp.eq.s32.totalorder %s29, 1
      %p279 = por %p277, %p278
      %p280 = scmp.ne.s32.totalorder %s271, %s272
      %p281 = scmp.eq.s32.totalorder %s29, 0
      %p282 = por %p280, %p281
      %p283 = scmp.ne.s32.totalorder %s271, %s272
      %p284 = scmp.eq.s32.totalorder %s30, 1
      %p285 = por %p283, %p284
      %p287 = scmp.ne.s32.totalorder %s272, %s286
      %p288 = scmp.eq.s32.totalorder %s30, 0
      %p289 = por %p287, %p288
      %s291 = sadd.s32 %s290, 1
      %p294 = scmp.eq.s32.totalorder %s24, 1
      %p295 = scmp.ne.s32.totalorder %s290, %s292
      %p296 = scmp.eq.s32.totalorder %s24, 0
      %p297 = por %p295, %p296
      %p298 = scmp.ne.s32.totalorder %s290, %s292
      %p299 = scmp.eq.s32.totalorder %s29, 1
      %p300 = por %p298, %p299
      %p301 = scmp.ne.s32.totalorder %s292, %s293
      %p302 = scmp.eq.s32.totalorder %s29, 0
      %p303 = por %p301, %p302
      %p304 = scmp.ne.s32.totalorder %s292, %s293
      %p305 = scmp.eq.s32.totalorder %s30, 1
      %p306 = por %p304, %p305
      %p308 = scmp.ne.s32.totalorder %s293, %s307
      %p309 = scmp.eq.s32.totalorder %s30, 0
      %p310 = por %p308, %p309
      %s312 = sadd.s32 %s311, 1
      %p315 = scmp.eq.s32.totalorder %s24, 1
      %p316 = scmp.ne.s32.totalorder %s311, %s313
      %p317 = scmp.eq.s32.totalorder %s24, 0
      %p318 = por %p316, %p317
      %p319 = scmp.ne.s32.totalorder %s311, %s313
      %p320 = scmp.eq.s32.totalorder %s29, 1
      %p321 = por %p319, %p320
      %p322 = scmp.ne.s32.totalorder %s313, %s314
      %p323 = scmp.eq.s32.totalorder %s29, 0
      %p324 = por %p322, %p323
      %p325 = scmp.ne.s32.totalorder %s313, %s314
      %p326 = scmp.eq.s32.totalorder %s30, 1
      %p327 = por %p325, %p326
      %p329 = scmp.ne.s32.totalorder %s314, %s328
      %p330 = scmp.eq.s32.totalorder %s30, 0
      %p331 = por %p329, %p330
      %s333 = sadd.s32 %s332, 1
      %p336 = scmp.eq.s32.totalorder %s24, 1
      %p337 = scmp.ne.s32.totalorder %s332, %s334
      %p338 = scmp.eq.s32.totalorder %s24, 0
      %p339 = por %p337, %p338
      %p340 = scmp.ne.s32.totalorder %s332, %s334
      %p341 = scmp.eq.s32.totalorder %s29, 1
      %p342 = por %p340, %p341
      %p343 = scmp.ne.s32.totalorder %s334, %s335
      %p344 = scmp.eq.s32.totalorder %s29, 0
      %p345 = por %p343, %p344
      %p346 = scmp.ne.s32.totalorder %s334, %s335
      %p347 = scmp.eq.s32.totalorder %s30, 1
      %p348 = por %p346, %p347
      %p350 = scmp.ne.s32.totalorder %s335, %s349
      %p351 = scmp.eq.s32.totalorder %s30, 0
      %p352 = por %p350, %p351
      %s354 = sadd.s32 %s353, 1
      %p357 = scmp.eq.s32.totalorder %s24, 1
      %p358 = scmp.ne.s32.totalorder %s353, %s355
      %p359 = scmp.eq.s32.totalorder %s24, 0
      %p360 = por %p358, %p359
      %p361 = scmp.ne.s32.totalorder %s353, %s355
      %p362 = scmp.eq.s32.totalorder %s29, 1
      %p363 = por %p361, %p362
      %p364 = scmp.ne.s32.totalorder %s355, %s356
      %p365 = scmp.eq.s32.totalorder %s29, 0
      %p366 = por %p364, %p365
      %p367 = scmp.ne.s32.totalorder %s355, %s356
      %p368 = scmp.eq.s32.totalorder %s30, 1
      %p369 = por %p367, %p368
      %p371 = scmp.ne.s32.totalorder %s356, %s370
      %p372 = scmp.eq.s32.totalorder %s30, 0
      %p373 = por %p371, %p372
      %s375 = sadd.s32 %s374, 1
      %p378 = scmp.eq.s32.totalorder %s24, 1
      %p379 = scmp.ne.s32.totalorder %s374, %s376
      %p380 = scmp.eq.s32.totalorder %s24, 0
      %p381 = por %p379, %p380
      %p382 = scmp.ne.s32.totalorder %s374, %s376
      %p383 = scmp.eq.s32.totalorder %s29, 1
      %p384 = por %p382, %p383
      %p385 = scmp.ne.s32.totalorder %s376, %s377
      %p386 = scmp.eq.s32.totalorder %s29, 0
      %p387 = por %p385, %p386
      %p388 = scmp.ne.s32.totalorder %s376, %s377
      %p389 = scmp.eq.s32.totalorder %s30, 1
      %p390 = por %p388, %p389
      %p392 = scmp.ne.s32.totalorder %s377, %s391
      %p393 = scmp.eq.s32.totalorder %s30, 0
      %p394 = por %p392, %p393
      %s395 = ssub.s32 %s31, %s43
      %s396 = ssub.s32 %s32, %s39
      %s397 = sor.u32 %s395, %s396
      %p398 = scmp.eq.s32.totalorder %s397, 0
      %s400 = sadd.s32 %s399, 1
      %s401 = scalar_select %p398, %s399, %s400
      %p404 = pneg %p398
      %p405 = scmp.eq.s32.totalorder %s24, 1
      %p406 = por %p404, %p405
      %p407 = scmp.ne.s32.totalorder %s399, %s402
      %p408 = scmp.eq.s32.totalorder %s24, 0
      %p409 = por %p407, %p408
      %p410 = scmp.ne.s32.totalorder %s399, %s402
      %p411 = scmp.eq.s32.totalorder %s29, 1
      %p412 = por %p410, %p411
      %p413 = scmp.ne.s32.totalorder %s402, %s403
      %p414 = scmp.eq.s32.totalorder %s29, 0
      %p415 = por %p413, %p414
      %p416 = scmp.ne.s32.totalorder %s402, %s403
      %p417 = scmp.eq.s32.totalorder %s30, 1
      %p418 = por %p416, %p417
      %p420 = scmp.ne.s32.totalorder %s403, %s419
      %p421 = scmp.eq.s32.totalorder %s30, 0
      %p422 = por %p420, %p421
      %p423 = scmp.le.s32.totalorder 1, %s24
      %p424 = scmp.lt.s32.totalorder %s24, 3
      %p425 = pnand %p423, %p424
      %p426 = pneg %p425
      // Predicated region
      $region9: #{vrca_forward.3} parent=5 // pred_check
        _
      $region10: #{vrca_forward.3} parent=5 // pred_check_branch
        %428 = sbr.rel (%p425) target = $region12
      $region11: #{vrca_forward.3} parent=5 // pred_region
        %s429 = ssub.s32 %s24, 1
        // Predicated region
        $region13: #{vrca_forward.3} parent=11 // pred_check
          %p430 = pneg %p219
        $region14: #{vrca_forward.3} parent=11 // pred_check_branch
          %432 = sbr.rel (%p430) target = $region16
        $region15: #{vrca_forward.3} parent=11 // pred_region
          _
        $region16: #{vrca_forward.3} parent=11 // pred_fallthru
          _
        // Predicated region
        $region17: #{vrca_forward.3} parent=11 // pred_check
          %p433 = pneg %p240
        $region18: #{vrca_forward.3} parent=11 // pred_check_branch
          %435 = sbr.rel (%p433) target = $region20
        $region19: #{vrca_forward.3} parent=11 // pred_region
          _
        $region20: #{vrca_forward.3} parent=11 // pred_fallthru
          _
        // Predicated region
        $region21: #{vrca_forward.3} parent=11 // pred_check
          %p436 = pneg %p261
        $region22: #{vrca_forward.3} parent=11 // pred_check_branch
          %438 = sbr.rel (%p436) target = $region24
        $region23: #{vrca_forward.3} parent=11 // pred_region
          _
        $region24: #{vrca_forward.3} parent=11 // pred_fallthru
          _
        // Predicated region
        $region25: #{vrca_forward.3} parent=11 // pred_check
          %p439 = pneg %p282
        $region26: #{vrca_forward.3} parent=11 // pred_check_branch
          %441 = sbr.rel (%p439) target = $region28
        $region27: #{vrca_forward.3} parent=11 // pred_region
          _
        $region28: #{vrca_forward.3} parent=11 // pred_fallthru
          _
        // Predicated region
        $region29: #{vrca_forward.3} parent=11 // pred_check
          %p442 = pneg %p303
        $region30: #{vrca_forward.3} parent=11 // pred_check_branch
          %444 = sbr.rel (%p442) target = $region32
        $region31: #{vrca_forward.3} parent=11 // pred_region
          _
        $region32: #{vrca_forward.3} parent=11 // pred_fallthru
          _
        // Predicated region
        $region33: #{vrca_forward.3} parent=11 // pred_check
          %p445 = pneg %p324
        $region34: #{vrca_forward.3} parent=11 // pred_check_branch
          %447 = sbr.rel (%p445) target = $region36
        $region35: #{vrca_forward.3} parent=11 // pred_region
          _
        $region36: #{vrca_forward.3} parent=11 // pred_fallthru
          _
        // Predicated region
        $region37: #{vrca_forward.3} parent=11 // pred_check
          %p448 = pneg %p345
        $region38: #{vrca_forward.3} parent=11 // pred_check_branch
          %450 = sbr.rel (%p448) target = $region40
        $region39: #{vrca_forward.3} parent=11 // pred_region
          _
        $region40: #{vrca_forward.3} parent=11 // pred_fallthru
          _
        // Predicated region
        $region41: #{vrca_forward.3} parent=11 // pred_check
          %p451 = pneg %p366
        $region42: #{vrca_forward.3} parent=11 // pred_check_branch
          %453 = sbr.rel (%p451) target = $region44
        $region43: #{vrca_forward.3} parent=11 // pred_region
          _
        $region44: #{vrca_forward.3} parent=11 // pred_fallthru
          _
        // Predicated region
        $region45: #{vrca_forward.3} parent=11 // pred_check
          %p454 = pneg %p387
        $region46: #{vrca_forward.3} parent=11 // pred_check_branch
          %456 = sbr.rel (%p454) target = $region48
        $region47: #{vrca_forward.3} parent=11 // pred_region
          _
        $region48: #{vrca_forward.3} parent=11 // pred_fallthru
          _
      $region12: #{vrca_forward.3} parent=5 // pred_fallthru
        _
      %p457 = scmp.lt.s32.totalorder %s24, 2
      // Predicated region
      $region49: #{vrca_forward.3} parent=5 // pred_check
        %p458 = pneg %p457
      $region50: #{vrca_forward.3} parent=5 // pred_check_branch
        %460 = sbr.rel (%p458) target = $region52
      $region51: #{vrca_forward.3} parent=5 // pred_region
        // Predicated region
        $region53: #{vrca_forward.3} parent=51 // pred_check
          %p461 = pneg %p56
        $region54: #{vrca_forward.3} parent=51 // pred_check_branch
          %463 = sbr.rel (%p461) target = $region56
        $region55: #{vrca_forward.3} parent=51 // pred_region
          %p464 = scmp.lt.s32.totalorder %s31, 1
          %s465 = scalar_select %p464, %s31, 1
          %s466 = smul.addr %s465, 8
          %s467 = scalar_lea.vmem %s0, %s466
        $region56: #{vrca_forward.3} parent=51 // pred_fallthru
          _
        // Predicated region
        $region57: #{vrca_forward.3} parent=51 // pred_check
          %p468 = pneg %p82
        $region58: #{vrca_forward.3} parent=51 // pred_check_branch
          %470 = sbr.rel (%p468) target = $region60
        $region59: #{vrca_forward.3} parent=51 // pred_region
          %p471 = scmp.lt.s32.totalorder %s31, 1
          %s472 = scalar_select %p471, %s31, 1
          %s473 = smul.addr %s472, 8
          %s474 = scalar_lea.vmem %s1, %s473
        $region60: #{vrca_forward.3} parent=51 // pred_fallthru
          _
        // Predicated region
        $region61: #{vrca_forward.3} parent=51 // pred_check
          %p475 = pneg %p110
        $region62: #{vrca_forward.3} parent=51 // pred_check_branch
          %477 = sbr.rel (%p475) target = $region64
        $region63: #{vrca_forward.3} parent=51 // pred_region
          %p478 = scmp.lt.s32.totalorder %s31, 1
          %s479 = scalar_select %p478, %s31, 1
          %p480 = scmp.lt.s32.totalorder %s32, 0
          %s481 = scalar_select %p480, %s32, 0
          %s482 = sadd.s32 %s481, %s479
          %s483 = smul.addr %s482, 8
          %s484 = scalar_lea.vmem %s2, %s483
        $region64: #{vrca_forward.3} parent=51 // pred_fallthru
          _
        // Predicated region
        $region65: #{vrca_forward.3} parent=51 // pred_check
          %p485 = pneg %p138
        $region66: #{vrca_forward.3} parent=51 // pred_check_branch
          %487 = sbr.rel (%p485) target = $region68
        $region67: #{vrca_forward.3} parent=51 // pred_region
          %p488 = scmp.lt.s32.totalorder %s31, 1
          %s489 = scalar_select %p488, %s31, 1
          %p490 = scmp.lt.s32.totalorder %s32, 0
          %s491 = scalar_select %p490, %s32, 0
          %s492 = sadd.s32 %s491, %s489
          %s493 = smul.addr %s492, 8
          %s494 = scalar_lea.vmem %s3, %s493
        $region68: #{vrca_forward.3} parent=51 // pred_fallthru
          _
        // Predicated region
        $region69: #{vrca_forward.3} parent=51 // pred_check
          %p495 = pneg %p164
        $region70: #{vrca_forward.3} parent=51 // pred_check_branch
          %497 = sbr.rel (%p495) target = $region72
        $region71: #{vrca_forward.3} parent=51 // pred_region
          %p498 = scmp.lt.s32.totalorder %s31, 1
          %s499 = scalar_select %p498, %s31, 1
          %s500 = smul.addr %s499, 8
          %s501 = scalar_lea.vmem %s4, %s500
        $region72: #{vrca_forward.3} parent=51 // pred_fallthru
          _
        // Predicated region
        $region73: #{vrca_forward.3} parent=51 // pred_check
          %p502 = pneg %p192
        $region74: #{vrca_forward.3} parent=51 // pred_check_branch
          %504 = sbr.rel (%p502) target = $region76
        $region75: #{vrca_forward.3} parent=51 // pred_region
          %p505 = scmp.lt.s32.totalorder %s31, 1
          %s506 = scalar_select %p505, %s31, 1
          %p507 = scmp.lt.s32.totalorder %s32, 0
          %s508 = scalar_select %p507, %s32, 0
          %s509 = sadd.s32 %s508, %s506
          %s510 = smul.addr %s509, 8
          %s511 = scalar_lea.vmem %s5, %s510
        $region76: #{vrca_forward.3} parent=51 // pred_fallthru
          _
      $region52: #{vrca_forward.3} parent=5 // pred_fallthru
        _
      %p512 = scmp.le.s32.totalorder 1, %s24
      %p513 = scmp.lt.s32.totalorder %s24, 3
      %p514 = pnand %p512, %p513
      %p515 = pneg %p514
      // Predicated region
      $region77: #{vrca_forward.3} parent=5 // pred_check
        _
      $region78: #{vrca_forward.3} parent=5 // pred_check_branch
        %517 = sbr.rel (%p514) target = $region80
      $region79: #{vrca_forward.3} parent=5 // pred_region
        %s518 = ssub.s32 %s24, 1
        %p519 = scmp.lt.s32.totalorder %s33, 1
        %s520 = scalar_select %p519, %s33, 1
        %s521 = smul.addr %s520, 8
        %s522 = scalar_lea.vmem %s0, %s521
        %p523 = pneg %p62
        %p524 = pneg %p59
        %p525 = scmp.lt.s32.totalorder %s33, 1
        %s526 = scalar_select %p525, %s33, 1
        %s527 = smul.addr %s526, 8
        %s528 = scalar_lea.vmem %s1, %s527
        %p529 = pneg %p88
        %p530 = pneg %p85
        %p531 = scmp.lt.s32.totalorder %s33, 1
        %s532 = scalar_select %p531, %s33, 1
        %p533 = scmp.lt.s32.totalorder %s34, 0
        %s534 = scalar_select %p533, %s34, 0
        %s535 = sadd.s32 %s534, %s532
        %s536 = smul.addr %s535, 8
        %s537 = scalar_lea.vmem %s2, %s536
        %p538 = pneg %p116
        %p539 = pneg %p113
        %p540 = scmp.lt.s32.totalorder %s33, 1
        %s541 = scalar_select %p540, %s33, 1
        %p542 = scmp.lt.s32.totalorder %s34, 0
        %s543 = scalar_select %p542, %s34, 0
        %s544 = sadd.s32 %s543, %s541
        %s545 = smul.addr %s544, 8
        %s546 = scalar_lea.vmem %s3, %s545
        %p547 = pneg %p144
        %p548 = pneg %p141
        %p549 = scmp.lt.s32.totalorder %s33, 1
        %s550 = scalar_select %p549, %s33, 1
        %s551 = smul.addr %s550, 8
        %s552 = scalar_lea.vmem %s4, %s551
        %p553 = pneg %p170
        %p554 = pneg %p167
        %p555 = scmp.lt.s32.totalorder %s33, 1
        %s556 = scalar_select %p555, %s33, 1
        %p557 = scmp.lt.s32.totalorder %s34, 0
        %s558 = scalar_select %p557, %s34, 0
        %s559 = sadd.s32 %s558, %s556
        %s560 = smul.addr %s559, 8
        %s561 = scalar_lea.vmem %s5, %s560
        %p562 = pneg %p198
        %p563 = pneg %p195
        %p564 = pneg %p219
        %p565 = pneg %p216
        %p566 = pneg %p240
        %p567 = pneg %p237
        %p568 = pneg %p261
        %p569 = pneg %p258
        %p570 = pneg %p282
        %p571 = pneg %p279
        %p572 = pneg %p303
        %p573 = pneg %p300
        %p574 = pneg %p324
        %p575 = pneg %p321
        %p576 = pneg %p345
        %p577 = pneg %p342
        %p578 = pneg %p366
        %p579 = pneg %p363
        %p580 = pneg %p387
        %p581 = pneg %p384
        %p582 = pneg %p415
        %p583 = pneg %p412
        %s584 = sand.u32 %s402, 1
        %s585 = scalar_lea.sflag [#allocation3], %s584
        %s586 = sand.u32 %s402, 1
        %s587 = smul.addr %s586, 8
        %s588 = scalar_lea.vmem [#allocation2], %s587
        %p589 = scmp.lt.s32.totalorder %s33, 1
        %s590 = scalar_select %p589, %s33, 1
        %s591 = smul.addr %s590, 8
        %s592 = scalar_lea.vmem %s0, %s591
        %p593 = scmp.lt.s32.totalorder %s33, 1
        %s594 = scalar_select %p593, %s33, 1
        %s595 = smul.addr %s594, 8
        %s596 = scalar_lea.vmem %s1, %s595
        %p597 = scmp.lt.s32.totalorder %s33, 1
        %s598 = scalar_select %p597, %s33, 1
        %p599 = scmp.lt.s32.totalorder %s34, 0
        %s600 = scalar_select %p599, %s34, 0
        %s601 = sadd.s32 %s600, %s598
        %s602 = smul.addr %s601, 8
        %s603 = scalar_lea.vmem %s2, %s602
        %p604 = scmp.lt.s32.totalorder %s33, 1
        %s605 = scalar_select %p604, %s33, 1
        %p606 = scmp.lt.s32.totalorder %s34, 0
        %s607 = scalar_select %p606, %s34, 0
        %s608 = sadd.s32 %s607, %s605
        %s609 = smul.addr %s608, 8
        %s610 = scalar_lea.vmem %s3, %s609
        %p611 = scmp.lt.s32.totalorder %s33, 1
        %s612 = scalar_select %p611, %s33, 1
        %s613 = smul.addr %s612, 8
        %s614 = scalar_lea.vmem %s4, %s613
        %p615 = scmp.lt.s32.totalorder %s33, 1
        %s616 = scalar_select %p615, %s33, 1
        %p617 = scmp.lt.s32.totalorder %s34, 0
        %s618 = scalar_select %p617, %s34, 0
        %s619 = sadd.s32 %s618, %s616
        %s620 = smul.addr %s619, 8
        %s621 = scalar_lea.vmem %s5, %s620
        %v622 = vld [vmem:[%s592] sm:$0xff]
        %v623 = vld [vmem:[%s603] sm:$0xff]
        %v624 = vld [vmem:[%s596] sm:$0xff]
        %v625 = vld [vmem:[%s610] sm:$0xff]
        %v627 = vcombine.high %v623, %v623
        %v629 = vunpack.c.l.s4 1966171168
        %v630 = vunpack.c.0.s8 %v629
        %v631 = vlaneseq
        %v632 = vshrl.u32 %v631, 7
        %v633 = vsub.s32 %v630, %v632
        %v634 = vrot.slane %v623, %v633
        %v636 = vunpack.c.l.s4 1966171168
        %v637 = vunpack.c.0.s8 %v636
        %v638 = vlaneseq
        %v639 = vshrl.u32 %v638, 7
        %v640 = vsub.s32 %v637, %v639
        %v641 = vrot.slane %v627, %v640
        %v642 = vcombine.high %v634, %v634
        %v643 = vcombine.high %v641, %v641
        %v645 = vunpack.c.l.s4 1966171168
        %v646 = vunpack.c.0.s8 %v645
        %v647 = vlaneseq
        %v648 = vshrl.u32 %v647, 7
        %v649 = vsub.s32 %v646, %v648
        %v650 = vrot.slane %v634, %v649
        %v652 = vunpack.c.l.s4 1966171168
        %v653 = vunpack.c.0.s8 %v652
        %v654 = vlaneseq
        %v655 = vshrl.u32 %v654, 7
        %v656 = vsub.s32 %v653, %v655
        %v657 = vrot.slane %v641, %v656
        %v659 = vunpack.c.l.s4 1966171168
        %v660 = vunpack.c.0.s8 %v659
        %v661 = vlaneseq
        %v662 = vshrl.u32 %v661, 7
        %v663 = vsub.s32 %v660, %v662
        %v664 = vrot.slane %v642, %v663
        %v666 = vunpack.c.l.s4 1966171168
        %v667 = vunpack.c.0.s8 %v666
        %v668 = vlaneseq
        %v669 = vshrl.u32 %v668, 7
        %v670 = vsub.s32 %v667, %v669
        %v671 = vrot.slane %v643, %v670
        %v672 = vcombine.high %v650, %v650
        %v673 = vcombine.high %v657, %v657
        %v674 = vcombine.high %v664, %v664
        %v675 = vcombine.high %v671, %v671
        %v676 = vlaneseq
        %v677 = vshrl.u32 %v676, 7
        %v678 = vsub.s32 0, %v677
        %v679 = vrot.slane %v650, %v678
        %v680 = vlaneseq
        %v681 = vshrl.u32 %v680, 7
        %v682 = vsub.s32 0, %v681
        %v683 = vrot.slane %v664, %v682
        %v684 = vlaneseq
        %v685 = vshrl.u32 %v684, 7
        %v686 = vsub.s32 0, %v685
        %v687 = vrot.slane %v672, %v686
        %v688 = vlaneseq
        %v689 = vshrl.u32 %v688, 7
        %v690 = vsub.s32 0, %v689
        %v691 = vrot.slane %v674, %v690
        %v692 = vlaneseq
        %v693 = vshrl.u32 %v692, 7
        %v694 = vsub.s32 0, %v693
        %v695 = vrot.slane %v657, %v694
        %v696 = vlaneseq
        %v697 = vshrl.u32 %v696, 7
        %v698 = vsub.s32 0, %v697
        %v699 = vrot.slane %v671, %v698
        %v700 = vlaneseq
        %v701 = vshrl.u32 %v700, 7
        %v702 = vsub.s32 0, %v701
        %v703 = vrot.slane %v673, %v702
        %v704 = vlaneseq
        %v705 = vshrl.u32 %v704, 7
        %v706 = vsub.s32 0, %v705
        %v707 = vrot.slane %v675, %v706
        %vm716 = vcmp.lt.f32.partialorder %v622, %v679
        %vm717 = vcmp.lt.f32.partialorder %v622, %v683
        %vm718 = vcmp.lt.f32.partialorder %v622, %v687
        %vm719 = vcmp.lt.f32.partialorder %v622, %v691
        %vm720 = vcmp.lt.f32.partialorder %v622, %v695
        %vm721 = vcmp.lt.f32.partialorder %v622, %v699
        %vm722 = vcmp.lt.f32.partialorder %v622, %v703
        %vm723 = vcmp.lt.f32.partialorder %v622, %v707
        %v724 = vsel %vm716, 1, 0
        %v725 = vsel %vm717, 1, 0
        %v726 = vsel %vm718, 1, 0
        %v727 = vsel %vm719, 1, 0
        %v728 = vsel %vm720, 1, 0
        %v729 = vsel %vm721, 1, 0
        %v730 = vsel %vm722, 1, 0
        %v731 = vsel %vm723, 1, 0
        %v732 = vcvt.s32.f32 %v724
        %v733 = vcvt.s32.f32 %v725
        %v734 = vcvt.s32.f32 %v726
        %v735 = vcvt.s32.f32 %v727
        %v736 = vcvt.s32.f32 %v728
        %v737 = vcvt.s32.f32 %v729
        %v738 = vcvt.s32.f32 %v730
        %v739 = vcvt.s32.f32 %v731
        %v740 = vadd.f32 %v624, 1.0
        %v741 = vmul.f32 %v740, %v740
        %v742 = vsub.f32 64.0, %v624
        %v743 = vmul.f32 %v742, %v742
        %v744 = vadd.f32 %v625, 32.0
        %v745 = vadd.f32 %v744, 1.0
        %v746 = vmul.f32 %v745, %v745
        %v747 = vsub.f32 32.0, %v625
        %v748 = vmul.f32 %v747, %v747
        %v750 = vcombine.high %v746, %v746
        %v752 = vunpack.c.l.s4 1966171168
        %v753 = vunpack.c.0.s8 %v752
        %v754 = vlaneseq
        %v755 = vshrl.u32 %v754, 7
        %v756 = vsub.s32 %v753, %v755
        %v757 = vrot.slane %v746, %v756
        %v759 = vunpack.c.l.s4 1966171168
        %v760 = vunpack.c.0.s8 %v759
        %v761 = vlaneseq
        %v762 = vshrl.u32 %v761, 7
        %v763 = vsub.s32 %v760, %v762
        %v764 = vrot.slane %v750, %v763
        %v765 = vcombine.high %v757, %v757
        %v766 = vcombine.high %v764, %v764
        %v768 = vunpack.c.l.s4 1966171168
        %v769 = vunpack.c.0.s8 %v768
        %v770 = vlaneseq
        %v771 = vshrl.u32 %v770, 7
        %v772 = vsub.s32 %v769, %v771
        %v773 = vrot.slane %v757, %v772
        %v775 = vunpack.c.l.s4 1966171168
        %v776 = vunpack.c.0.s8 %v775
        %v777 = vlaneseq
        %v778 = vshrl.u32 %v777, 7
        %v779 = vsub.s32 %v776, %v778
        %v780 = vrot.slane %v764, %v779
        %v782 = vunpack.c.l.s4 1966171168
        %v783 = vunpack.c.0.s8 %v782
        %v784 = vlaneseq
        %v785 = vshrl.u32 %v784, 7
        %v786 = vsub.s32 %v783, %v785
        %v787 = vrot.slane %v765, %v786
        %v789 = vunpack.c.l.s4 1966171168
        %v790 = vunpack.c.0.s8 %v789
        %v791 = vlaneseq
        %v792 = vshrl.u32 %v791, 7
        %v793 = vsub.s32 %v790, %v792
        %v794 = vrot.slane %v766, %v793
        %v795 = vcombine.high %v773, %v773
        %v796 = vcombine.high %v780, %v780
        %v797 = vcombine.high %v787, %v787
        %v798 = vcombine.high %v794, %v794
        %v799 = vlaneseq
        %v800 = vshrl.u32 %v799, 7
        %v801 = vsub.s32 0, %v800
        %v802 = vrot.slane %v773, %v801
        %v803 = vlaneseq
        %v804 = vshrl.u32 %v803, 7
        %v805 = vsub.s32 0, %v804
        %v806 = vrot.slane %v787, %v805
        %v807 = vlaneseq
        %v808 = vshrl.u32 %v807, 7
        %v809 = vsub.s32 0, %v808
        %v810 = vrot.slane %v795, %v809
        %v811 = vlaneseq
        %v812 = vshrl.u32 %v811, 7
        %v813 = vsub.s32 0, %v812
        %v814 = vrot.slane %v797, %v813
        %v815 = vlaneseq
        %v816 = vshrl.u32 %v815, 7
        %v817 = vsub.s32 0, %v816
        %v818 = vrot.slane %v780, %v817
        %v819 = vlaneseq
        %v820 = vshrl.u32 %v819, 7
        %v821 = vsub.s32 0, %v820
        %v822 = vrot.slane %v794, %v821
        %v823 = vlaneseq
        %v824 = vshrl.u32 %v823, 7
        %v825 = vsub.s32 0, %v824
        %v826 = vrot.slane %v796, %v825
        %v827 = vlaneseq
        %v828 = vshrl.u32 %v827, 7
        %v829 = vsub.s32 0, %v828
        %v830 = vrot.slane %v798, %v829
        %v839 = vsub.f32 %v741, %v802
        %v840 = vsub.f32 %v741, %v806
        %v841 = vsub.f32 %v741, %v810
        %v842 = vsub.f32 %v741, %v814
        %v843 = vsub.f32 %v741, %v818
        %v844 = vsub.f32 %v741, %v822
        %v845 = vsub.f32 %v741, %v826
        %v846 = vsub.f32 %v741, %v830
        %v847 = vmul.f32 %v839, %v732
        %v848 = vmul.f32 %v840, %v733
        %v849 = vmul.f32 %v841, %v734
        %v850 = vmul.f32 %v842, %v735
        %v851 = vmul.f32 %v843, %v736
        %v852 = vmul.f32 %v844, %v737
        %v853 = vmul.f32 %v845, %v738
        %v854 = vmul.f32 %v846, %v739
        %vm855 = vcmask 261120
        %v856 = vsel %vm855, %v847, 0.0
        %857 = vadd.xlane.f32.xlu0 %v856
        %v858 = vpop.xlane.xlu0 %857
        %v859 = vsel %vm855, %v848, 0.0
        %860 = vadd.xlane.f32.xlu0 %v859
        %v861 = vpop.xlane.xlu0 %860
        %v862 = vsel %vm855, %v849, 0.0
        %863 = vadd.xlane.f32.xlu0 %v862
        %v864 = vpop.xlane.xlu0 %863
        %v865 = vsel %vm855, %v850, 0.0
        %866 = vadd.xlane.f32.xlu0 %v865
        %v867 = vpop.xlane.xlu0 %866
        %v868 = vsel %vm855, %v851, 0.0
        %869 = vadd.xlane.f32.xlu0 %v868
        %v870 = vpop.xlane.xlu0 %869
        %v871 = vsel %vm855, %v852, 0.0
        %872 = vadd.xlane.f32.xlu0 %v871
        %v873 = vpop.xlane.xlu0 %872
        %v874 = vsel %vm855, %v853, 0.0
        %875 = vadd.xlane.f32.xlu0 %v874
        %v876 = vpop.xlane.xlu0 %875
        %v877 = vsel %vm855, %v854, 0.0
        %878 = vadd.xlane.f32.xlu0 %v877
        %v879 = vpop.xlane.xlu0 %878
        %v880 = vadd.f32 %v858, 78000.0
        %v881 = vadd.f32 %v861, 78000.0
        %v882 = vadd.f32 %v864, 78000.0
        %v883 = vadd.f32 %v867, 78000.0
        %v884 = vadd.f32 %v870, 78000.0
        %v885 = vadd.f32 %v873, 78000.0
        %v886 = vadd.f32 %v876, 78000.0
        %v887 = vadd.f32 %v879, 78000.0
        %v889 = vcombine.high %v748, %v748
        %v891 = vunpack.c.l.s4 1966171168
        %v892 = vunpack.c.0.s8 %v891
        %v893 = vlaneseq
        %v894 = vshrl.u32 %v893, 7
        %v895 = vsub.s32 %v892, %v894
        %v896 = vrot.slane %v748, %v895
        %v898 = vunpack.c.l.s4 1966171168
        %v899 = vunpack.c.0.s8 %v898
        %v900 = vlaneseq
        %v901 = vshrl.u32 %v900, 7
        %v902 = vsub.s32 %v899, %v901
        %v903 = vrot.slane %v889, %v902
        %v904 = vcombine.high %v896, %v896
        %v905 = vcombine.high %v903, %v903
        %v907 = vunpack.c.l.s4 1966171168
        %v908 = vunpack.c.0.s8 %v907
        %v909 = vlaneseq
        %v910 = vshrl.u32 %v909, 7
        %v911 = vsub.s32 %v908, %v910
        %v912 = vrot.slane %v896, %v911
        %v914 = vunpack.c.l.s4 1966171168
        %v915 = vunpack.c.0.s8 %v914
        %v916 = vlaneseq
        %v917 = vshrl.u32 %v916, 7
        %v918 = vsub.s32 %v915, %v917
        %v919 = vrot.slane %v903, %v918
        %v921 = vunpack.c.l.s4 1966171168
        %v922 = vunpack.c.0.s8 %v921
        %v923 = vlaneseq
        %v924 = vshrl.u32 %v923, 7
        %v925 = vsub.s32 %v922, %v924
        %v926 = vrot.slane %v904, %v925
        %v928 = vunpack.c.l.s4 1966171168
        %v929 = vunpack.c.0.s8 %v928
        %v930 = vlaneseq
        %v931 = vshrl.u32 %v930, 7
        %v932 = vsub.s32 %v929, %v931
        %v933 = vrot.slane %v905, %v932
        %v934 = vcombine.high %v912, %v912
        %v935 = vcombine.high %v919, %v919
        %v936 = vcombine.high %v926, %v926
        %v937 = vcombine.high %v933, %v933
        %v938 = vlaneseq
        %v939 = vshrl.u32 %v938, 7
        %v940 = vsub.s32 0, %v939
        %v941 = vrot.slane %v912, %v940
        %v942 = vlaneseq
        %v943 = vshrl.u32 %v942, 7
        %v944 = vsub.s32 0, %v943
        %v945 = vrot.slane %v926, %v944
        %v946 = vlaneseq
        %v947 = vshrl.u32 %v946, 7
        %v948 = vsub.s32 0, %v947
        %v949 = vrot.slane %v934, %v948
        %v950 = vlaneseq
        %v951 = vshrl.u32 %v950, 7
        %v952 = vsub.s32 0, %v951
        %v953 = vrot.slane %v936, %v952
        %v954 = vlaneseq
        %v955 = vshrl.u32 %v954, 7
        %v956 = vsub.s32 0, %v955
        %v957 = vrot.slane %v919, %v956
        %v958 = vlaneseq
        %v959 = vshrl.u32 %v958, 7
        %v960 = vsub.s32 0, %v959
        %v961 = vrot.slane %v933, %v960
        %v962 = vlaneseq
        %v963 = vshrl.u32 %v962, 7
        %v964 = vsub.s32 0, %v963
        %v965 = vrot.slane %v935, %v964
        %v966 = vlaneseq
        %v967 = vshrl.u32 %v966, 7
        %v968 = vsub.s32 0, %v967
        %v969 = vrot.slane %v937, %v968
        %v978 = vsub.f32 %v743, %v941
        %v979 = vsub.f32 %v743, %v945
        %v980 = vsub.f32 %v743, %v949
        %v981 = vsub.f32 %v743, %v953
        %v982 = vsub.f32 %v743, %v957
        %v983 = vsub.f32 %v743, %v961
        %v984 = vsub.f32 %v743, %v965
        %v985 = vsub.f32 %v743, %v969
        %v986 = vmul.f32 %v978, %v732
        %v987 = vmul.f32 %v979, %v733
        %v988 = vmul.f32 %v980, %v734
        %v989 = vmul.f32 %v981, %v735
        %v990 = vmul.f32 %v982, %v736
        %v991 = vmul.f32 %v983, %v737
        %v992 = vmul.f32 %v984, %v738
        %v993 = vmul.f32 %v985, %v739
        %v994 = vsel %vm855, %v986, 0.0
        %995 = vadd.xlane.f32.xlu0 %v994
        %v996 = vpop.xlane.xlu0 %995
        %v997 = vsel %vm855, %v987, 0.0
        %998 = vadd.xlane.f32.xlu0 %v997
        %v999 = vpop.xlane.xlu0 %998
        %v1000 = vsel %vm855, %v988, 0.0
        %1001 = vadd.xlane.f32.xlu0 %v1000
        %v1002 = vpop.xlane.xlu0 %1001
        %v1003 = vsel %vm855, %v989, 0.0
        %1004 = vadd.xlane.f32.xlu0 %v1003
        %v1005 = vpop.xlane.xlu0 %1004
        %v1006 = vsel %vm855, %v990, 0.0
        %1007 = vadd.xlane.f32.xlu0 %v1006
        %v1008 = vpop.xlane.xlu0 %1007
        %v1009 = vsel %vm855, %v991, 0.0
        %1010 = vadd.xlane.f32.xlu0 %v1009
        %v1011 = vpop.xlane.xlu0 %1010
        %v1012 = vsel %vm855, %v992, 0.0
        %1013 = vadd.xlane.f32.xlu0 %v1012
        %v1014 = vpop.xlane.xlu0 %1013
        %v1015 = vsel %vm855, %v993, 0.0
        %1016 = vadd.xlane.f32.xlu0 %v1015
        %v1017 = vpop.xlane.xlu0 %1016
        %v1018 = vadd.f32 %v996, 11440.0
        %v1019 = vadd.f32 %v999, 11440.0
        %v1020 = vadd.f32 %v1002, 11440.0
        %v1021 = vadd.f32 %v1005, 11440.0
        %v1022 = vadd.f32 %v1008, 11440.0
        %v1023 = vadd.f32 %v1011, 11440.0
        %v1024 = vadd.f32 %v1014, 11440.0
        %v1025 = vadd.f32 %v1017, 11440.0
        %v1026 = vmul.f32 %v880, 6.0
        %v1027 = vmul.f32 %v881, 6.0
        %v1028 = vmul.f32 %v882, 6.0
        %v1029 = vmul.f32 %v883, 6.0
        %v1030 = vmul.f32 %v884, 6.0
        %v1031 = vmul.f32 %v885, 6.0
        %v1032 = vmul.f32 %v886, 6.0
        %v1033 = vmul.f32 %v887, 6.0
        %v1034 = vsub.f32 %v1026, 268320.0
        %v1035 = vsub.f32 %v1027, 268320.0
        %v1036 = vsub.f32 %v1028, 268320.0
        %v1037 = vsub.f32 %v1029, 268320.0
        %v1038 = vsub.f32 %v1030, 268320.0
        %v1039 = vsub.f32 %v1031, 268320.0
        %v1040 = vsub.f32 %v1032, 268320.0
        %v1041 = vsub.f32 %v1033, 268320.0
        %v1042 = vrcp.pop 29968.662
        %v1043 = vmul.f32 %v1034, %v1042
        %v1044 = vmul.f32 %v1035, %v1042
        %v1045 = vmul.f32 %v1036, %v1042
        %v1046 = vmul.f32 %v1037, %v1042
        %v1047 = vmul.f32 %v1038, %v1042
        %v1048 = vmul.f32 %v1039, %v1042
        %v1049 = vmul.f32 %v1040, %v1042
        %v1050 = vmul.f32 %v1041, %v1042
        %v1051 = vmul.f32 %v1018, 6.0
        %v1052 = vmul.f32 %v1019, 6.0
        %v1053 = vmul.f32 %v1020, 6.0
        %v1054 = vmul.f32 %v1021, 6.0
        %v1055 = vmul.f32 %v1022, 6.0
        %v1056 = vmul.f32 %v1023, 6.0
        %v1057 = vmul.f32 %v1024, 6.0
        %v1058 = vmul.f32 %v1025, 6.0
        %v1059 = vsub.f32 %v1051, 268320.0
        %v1060 = vsub.f32 %v1052, 268320.0
        %v1061 = vsub.f32 %v1053, 268320.0
        %v1062 = vsub.f32 %v1054, 268320.0
        %v1063 = vsub.f32 %v1055, 268320.0
        %v1064 = vsub.f32 %v1056, 268320.0
        %v1065 = vsub.f32 %v1057, 268320.0
        %v1066 = vsub.f32 %v1058, 268320.0
        %v1067 = vmul.f32 %v1059, %v1042
        %v1068 = vmul.f32 %v1060, %v1042
        %v1069 = vmul.f32 %v1061, %v1042
        %v1070 = vmul.f32 %v1062, %v1042
        %v1071 = vmul.f32 %v1063, %v1042
        %v1072 = vmul.f32 %v1064, %v1042
        %v1073 = vmul.f32 %v1065, %v1042
        %v1074 = vmul.f32 %v1066, %v1042
        %v1075 = vmul.f32 %v1043, %v1043
        %v1076 = vmul.f32 %v1044, %v1044
        %v1077 = vmul.f32 %v1045, %v1045
        %v1078 = vmul.f32 %v1046, %v1046
        %v1079 = vmul.f32 %v1047, %v1047
        %v1080 = vmul.f32 %v1048, %v1048
        %v1081 = vmul.f32 %v1049, %v1049
        %v1082 = vmul.f32 %v1050, %v1050
        %v1083 = vmul.f32 %v1067, %v1067
        %v1084 = vmul.f32 %v1068, %v1068
        %v1085 = vmul.f32 %v1069, %v1069
        %v1086 = vmul.f32 %v1070, %v1070
        %v1087 = vmul.f32 %v1071, %v1071
        %v1088 = vmul.f32 %v1072, %v1072
        %v1089 = vmul.f32 %v1073, %v1073
        %v1090 = vmul.f32 %v1074, %v1074
        %v1091 = vadd.f32 %v1075, %v1083
        %v1092 = vadd.f32 %v1076, %v1084
        %v1093 = vadd.f32 %v1077, %v1085
        %v1094 = vadd.f32 %v1078, %v1086
        %v1095 = vadd.f32 %v1079, %v1087
        %v1096 = vadd.f32 %v1080, %v1088
        %v1097 = vadd.f32 %v1081, %v1089
        %v1098 = vadd.f32 %v1082, %v1090
        %v1099 = vmul.f32 %v1043, -1.7573925
        %v1100 = vmul.f32 %v1044, -1.7573925
        %v1101 = vmul.f32 %v1045, -1.7573925
        %v1102 = vmul.f32 %v1046, -1.7573925
        %v1103 = vmul.f32 %v1047, -1.7573925
        %v1104 = vmul.f32 %v1048, -1.7573925
        %v1105 = vmul.f32 %v1049, -1.7573925
        %v1106 = vmul.f32 %v1050, -1.7573925
        %v1107 = vmul.f32 %v1099, %v1067
        %v1108 = vmul.f32 %v1100, %v1068
        %v1109 = vmul.f32 %v1101, %v1069
        %v1110 = vmul.f32 %v1102, %v1070
        %v1111 = vmul.f32 %v1103, %v1071
        %v1112 = vmul.f32 %v1104, %v1072
        %v1113 = vmul.f32 %v1105, %v1073
        %v1114 = vmul.f32 %v1106, %v1074
        %v1115 = vsub.f32 %v1091, %v1107
        %v1116 = vsub.f32 %v1092, %v1108
        %v1117 = vsub.f32 %v1093, %v1109
        %v1118 = vsub.f32 %v1094, %v1110
        %v1119 = vsub.f32 %v1095, %v1111
        %v1120 = vsub.f32 %v1096, %v1112
        %v1121 = vsub.f32 %v1097, %v1113
        %v1122 = vsub.f32 %v1098, %v1114
        %v1123 = vmul.f32 %v1115, 2.194013
        %v1124 = vmul.f32 %v1116, 2.194013
        %v1125 = vmul.f32 %v1117, 2.194013
        %v1126 = vmul.f32 %v1118, 2.194013
        %v1127 = vmul.f32 %v1119, 2.194013
        %v1128 = vmul.f32 %v1120, 2.194013
        %v1129 = vmul.f32 %v1121, 2.194013
        %v1130 = vmul.f32 %v1122, 2.194013
        %v1131 = vmin.f32 %v1123, 3.1891608
        %v1132 = vmin.f32 %v1124, 3.1891608
        %v1133 = vmin.f32 %v1125, 3.1891608
        %v1134 = vmin.f32 %v1126, 3.1891608
        %v1135 = vmin.f32 %v1127, 3.1891608
        %v1136 = vmin.f32 %v1128, 3.1891608
        %v1137 = vmin.f32 %v1129, 3.1891608
        %v1138 = vmin.f32 %v1130, 3.1891608
        %v1139 = vadd.f32 %v1131, 1e-06
        %v1140 = vadd.f32 %v1132, 1e-06
        %v1141 = vadd.f32 %v1133, 1e-06
        %v1142 = vadd.f32 %v1134, 1e-06
        %v1143 = vadd.f32 %v1135, 1e-06
        %v1144 = vadd.f32 %v1136, 1e-06
        %v1145 = vadd.f32 %v1137, 1e-06
        %v1146 = vadd.f32 %v1138, 1e-06
        %v1147 = vrcp.pop %v1139
        %v1148 = vrcp.pop %v1140
        %v1149 = vrcp.pop %v1141
        %v1150 = vrcp.pop %v1142
        %v1151 = vrcp.pop %v1143
        %v1152 = vrcp.pop %v1144
        %v1153 = vrcp.pop %v1145
        %v1154 = vrcp.pop %v1146
        %v1163 = vlaneseq
        %v1164 = vand.u32 %v1163, 127
        %v1165 = vlaneseq
        %v1166 = vshrl.u32 %v1165, 7
        %v1167 = vsub.s32 %v1164, %v1166
        %v1168 = vrot.slane %v1147, %v1167
        %v1169 = vlaneseq
        %v1170 = vshrl.u32 %v1169, 7
        %v1171 = vsub.s32 %v1164, %v1170
        %v1172 = vrot.slane %v1148, %v1171
        %v1173 = vlaneseq
        %v1174 = vshrl.u32 %v1173, 7
        %v1175 = vsub.s32 %v1164, %v1174
        %v1176 = vrot.slane %v1149, %v1175
        %v1177 = vlaneseq
        %v1178 = vshrl.u32 %v1177, 7
        %v1179 = vsub.s32 %v1164, %v1178
        %v1180 = vrot.slane %v1150, %v1179
        %v1181 = vlaneseq
        %v1182 = vshrl.u32 %v1181, 7
        %v1183 = vsub.s32 %v1164, %v1182
        %v1184 = vrot.slane %v1151, %v1183
        %v1185 = vlaneseq
        %v1186 = vshrl.u32 %v1185, 7
        %v1187 = vsub.s32 %v1164, %v1186
        %v1188 = vrot.slane %v1152, %v1187
        %v1189 = vlaneseq
        %v1190 = vshrl.u32 %v1189, 7
        %v1191 = vsub.s32 %v1164, %v1190
        %v1192 = vrot.slane %v1153, %v1191
        %v1193 = vlaneseq
        %v1194 = vshrl.u32 %v1193, 7
        %v1195 = vsub.s32 %v1164, %v1194
        %v1196 = vrot.slane %v1154, %v1195
        %vm1197 = vcmask 1041409
        %v1198 = vsel %vm1197, %v1172, %v1168
        %vm1199 = vcmask 1042434
        %v1200 = vsel %vm1199, %v1176, %v1198
        %vm1201 = vcmask 1043459
        %v1202 = vsel %vm1201, %v1180, %v1200
        %vm1203 = vcmask 1044484
        %v1204 = vsel %vm1203, %v1184, %v1202
        %vm1205 = vcmask 1045509
        %v1206 = vsel %vm1205, %v1188, %v1204
        %vm1207 = vcmask 1046534
        %v1208 = vsel %vm1207, %v1192, %v1206
        %vm1209 = vcmask 1047559
        %v1210 = vsel %vm1209, %v1196, %v1208
        %vm1212 = vcmask 64512
        %v1213 = vsel %vm1212, %v1210, 0.0
        %1214 = vadd.xlane.f32.xlu0 %v1213
        %v1215 = vpop.xlane.xlu0 %1214
        %v1217 = vlaneseq
        %v1218 = vshrl.u32 %v1217, 7
        %v1219 = vsub.s32 0, %v1218
        %v1220 = vrot.slane %v1215, %v1219
        %v1221 = vlaneseq
        %v1222 = vshrl.u32 %v1221, 7
        %v1223 = vsub.s32 1, %v1222
        %v1224 = vrot.slane %v1215, %v1223
        %v1225 = vlaneseq
        %v1226 = vshrl.u32 %v1225, 7
        %v1227 = vsub.s32 2, %v1226
        %v1228 = vrot.slane %v1215, %v1227
        %v1229 = vlaneseq
        %v1230 = vshrl.u32 %v1229, 7
        %v1231 = vsub.s32 3, %v1230
        %v1232 = vrot.slane %v1215, %v1231
        %v1233 = vlaneseq
        %v1234 = vshrl.u32 %v1233, 7
        %v1235 = vsub.s32 4, %v1234
        %v1236 = vrot.slane %v1215, %v1235
        %v1237 = vlaneseq
        %v1238 = vshrl.u32 %v1237, 7
        %v1239 = vsub.s32 5, %v1238
        %v1240 = vrot.slane %v1215, %v1239
        %v1241 = vlaneseq
        %v1242 = vshrl.u32 %v1241, 7
        %v1243 = vsub.s32 6, %v1242
        %v1244 = vrot.slane %v1215, %v1243
        %v1245 = vlaneseq
        %v1246 = vshrl.u32 %v1245, 7
        %v1247 = vsub.s32 7, %v1246
        %v1248 = vrot.slane %v1215, %v1247
        %v1257 = vrcp.pop %v1220
        %v1258 = vmul.f32 %v1147, %v1257
        %v1259 = vrcp.pop %v1224
        %v1260 = vmul.f32 %v1148, %v1259
        %v1261 = vrcp.pop %v1228
        %v1262 = vmul.f32 %v1149, %v1261
        %v1263 = vrcp.pop %v1232
        %v1264 = vmul.f32 %v1150, %v1263
        %v1265 = vrcp.pop %v1236
        %v1266 = vmul.f32 %v1151, %v1265
        %v1267 = vrcp.pop %v1240
        %v1268 = vmul.f32 %v1152, %v1267
        %v1269 = vrcp.pop %v1244
        %v1270 = vmul.f32 %v1153, %v1269
        %v1271 = vrcp.pop %v1248
        %v1272 = vmul.f32 %v1154, %v1271
        %v1273 = vld [vmem:[%s614] sm:$0xff]
        %v1274 = vld [vmem:[%s6] sm:$0x1]
        %v1276 = vlaneseq
        %v1277 = vshrl.u32 %v1276, 7
        %v1278 = vsub.s32 0, %v1277
        %v1279 = vrot.slane %v1274, %v1278
        %1289 = vset.pattern.permute.xlu0 0
        %1290 = vperm.xlu0 %1289, %v1258
        %v1291 = vpop.permute.xlu0 %1290
        %1292 = vset.pattern.permute.xlu0 0
        %1293 = vperm.xlu0 %1292, %v1260
        %v1294 = vpop.permute.xlu0 %1293
        %1295 = vset.pattern.permute.xlu0 0
        %1296 = vperm.xlu0 %1295, %v1262
        %v1297 = vpop.permute.xlu0 %1296
        %1298 = vset.pattern.permute.xlu0 0
        %1299 = vperm.xlu0 %1298, %v1264
        %v1300 = vpop.permute.xlu0 %1299
        %1301 = vset.pattern.permute.xlu0 0
        %1302 = vperm.xlu0 %1301, %v1266
        %v1303 = vpop.permute.xlu0 %1302
        %1304 = vset.pattern.permute.xlu0 0
        %1305 = vperm.xlu0 %1304, %v1268
        %v1306 = vpop.permute.xlu0 %1305
        %1307 = vset.pattern.permute.xlu0 0
        %1308 = vperm.xlu0 %1307, %v1270
        %v1309 = vpop.permute.xlu0 %1308
        %1310 = vset.pattern.permute.xlu0 0
        %1311 = vperm.xlu0 %1310, %v1272
        %v1312 = vpop.permute.xlu0 %1311
        %v1313 = vlaneseq
        %v1314 = vshrl.u32 %v1313, 7
        %v1315 = vsub.s32 %v1164, %v1314
        %v1316 = vrot.slane %v1291, %v1315
        %v1317 = vlaneseq
        %v1318 = vshrl.u32 %v1317, 7
        %v1319 = vsub.s32 %v1164, %v1318
        %v1320 = vrot.slane %v1294, %v1319
        %v1321 = vlaneseq
        %v1322 = vshrl.u32 %v1321, 7
        %v1323 = vsub.s32 %v1164, %v1322
        %v1324 = vrot.slane %v1297, %v1323
        %v1325 = vlaneseq
        %v1326 = vshrl.u32 %v1325, 7
        %v1327 = vsub.s32 %v1164, %v1326
        %v1328 = vrot.slane %v1300, %v1327
        %v1329 = vlaneseq
        %v1330 = vshrl.u32 %v1329, 7
        %v1331 = vsub.s32 %v1164, %v1330
        %v1332 = vrot.slane %v1303, %v1331
        %v1333 = vlaneseq
        %v1334 = vshrl.u32 %v1333, 7
        %v1335 = vsub.s32 %v1164, %v1334
        %v1336 = vrot.slane %v1306, %v1335
        %v1337 = vlaneseq
        %v1338 = vshrl.u32 %v1337, 7
        %v1339 = vsub.s32 %v1164, %v1338
        %v1340 = vrot.slane %v1309, %v1339
        %v1341 = vlaneseq
        %v1342 = vshrl.u32 %v1341, 7
        %v1343 = vsub.s32 %v1164, %v1342
        %v1344 = vrot.slane %v1312, %v1343
        %v1345 = vsel %vm1197, %v1320, %v1316
        %v1346 = vsel %vm1199, %v1324, %v1345
        %v1347 = vsel %vm1201, %v1328, %v1346
        %v1348 = vsel %vm1203, %v1332, %v1347
        %v1349 = vsel %vm1205, %v1336, %v1348
        %v1350 = vsel %vm1207, %v1340, %v1349
        %v1351 = vsel %vm1209, %v1344, %v1350
        %v1352 = vsel %vm1212, %v1351, 0
        %1354 = vmatprep.subr.mxu0 0.0
        %1355 = vmatpush1.msra.mxu0 %v1273
        %1356 = vmatprep.subr.mxu0 0.0
        %1357 = vmatpush1.msra.mxu0 0.0
        %1358 = vmatprep.subr.mxu0 0.0
        %1359 = vmatpush1.msra.mxu0 0.0
        %1360 = vmatprep.subr.mxu0 0.0
        %1361 = vmatpush1.msra.mxu0 0.0
        %1362 = vmatprep.subr.mxu0 0.0
        %1363 = vmatpush1.msra.mxu0 0.0
        %1364 = vmatprep.subr.mxu0 0.0
        %1365 = vmatpush1.msra.mxu0 0.0
        %1366 = vmatprep.subr.mxu0 0.0
        %1367 = vmatpush1.msra.mxu0 0.0
        %1368 = vmatprep.subr.mxu0 0.0
        %1369 = vmatpush1.msra.mxu0 0.0
        %1370 = vmatprep.subr.mxu0 0.0
        %1371 = vmatpush1.msra.mxu0 0.0
        %1372 = vmatprep.subr.mxu0 0.0
        %1373 = vmatpush1.msra.mxu0 0.0
        %1374 = vmatprep.subr.mxu0 0.0
        %1375 = vmatpush1.msra.mxu0 0.0
        %1376 = vmatprep.subr.mxu0 0.0
        %1377 = vmatpush1.msra.mxu0 0.0
        %1378 = vmatprep.subr.mxu0 0.0
        %1379 = vmatpush1.msra.mxu0 0.0
        %1380 = vmatprep.subr.mxu0 0.0
        %1381 = vmatpush1.msra.mxu0 0.0
        %1382 = vmatprep.subr.mxu0 0.0
        %1383 = vmatpush1.msra.mxu0 0.0
        %1384 = vmatprep.subr.mxu0 0.0
        %1385 = vmatpush1.msra.mxu0 0.0
        %1386 = vmatprep.subr.mxu0 0.0
        %1387 = vmatpush1.msra.mxu0 0.0
        %1388 = vmatprep.subr.mxu0 0.0
        %1389 = vmatpush1.msra.mxu0 0.0
        %1390 = vmatprep.subr.mxu0 0.0
        %1391 = vmatpush1.msra.mxu0 0.0
        %1392 = vmatprep.subr.mxu0 0.0
        %1393 = vmatpush1.msra.mxu0 0.0
        %1394 = vmatprep.subr.mxu0 0.0
        %1395 = vmatpush1.msra.mxu0 0.0
        %1396 = vmatprep.subr.mxu0 0.0
        %1397 = vmatpush1.msra.mxu0 0.0
        %1398 = vmatprep.subr.mxu0 0.0
        %1399 = vmatpush1.msra.mxu0 0.0
        %1400 = vmatprep.subr.mxu0 0.0
        %1401 = vmatpush1.msra.mxu0 0.0
        %1402 = vmatprep.subr.mxu0 0.0
        %1403 = vmatpush1.msra.mxu0 0.0
        %1404 = vmatprep.subr.mxu0 0.0
        %1405 = vmatpush1.msra.mxu0 0.0
        %1406 = vmatprep.subr.mxu0 0.0
        %1407 = vmatpush1.msra.mxu0 0.0
        %1408 = vmatprep.subr.mxu0 0.0
        %1409 = vmatpush1.msra.mxu0 0.0
        %1410 = vmatprep.subr.mxu0 0.0
        %1411 = vmatpush1.msra.mxu0 0.0
        %1412 = vmatprep.subr.mxu0 0.0
        %1413 = vmatpush1.msra.mxu0 0.0
        %1414 = vmatprep.subr.mxu0 0.0
        %1415 = vmatpush1.msra.mxu0 0.0
        %1416 = vmatprep.subr.mxu0 0.0
        %1417 = vmatpush1.msra.mxu0 0.0
        %1418 = vmatprep.mubr.f32.mxu0 0.0
        %1419 = vmatmul.mubr.f32.gmra.mrb[0].mxu0 %v1352
        %v1420 = vpop.f32.mrb[0].mxu0
        %v1421 = vadd.f32 %v1279, %v1420
        %v1422 = vpop.f32.mrb[0].mxu0
        %1423 = vdwg.mxu0
        %v1424 = vld [vmem:[%s621] sm:$0xff]
        %v1425 = vadd.f32 %v1424, %v1421
        %v1426 = vld [vmem:[%s7] sm:$0x1]
        %v1427 = vld [vmem:[%s8] sm:$0x1]
        %v1428 = vsel %vm855, %v1425, 0.0
        %1429 = vadd.xlane.f32.xlu0 %v1428
        %v1430 = vpop.xlane.xlu0 %1429
        %v1431 = vrcp.pop 32.0
        %v1432 = vmul.f32 %v1430, %v1431
        %v1433 = vsub.f32 %v1425, %v1432
        %v1434 = vmul.f32 %v1433, %v1433
        %v1435 = vsel %vm855, %v1434, 0.0
        %1436 = vadd.xlane.f32.xlu0 %v1435
        %v1437 = vpop.xlane.xlu0 %1436
        %v1438 = vmul.f32 %v1437, %v1431
        %v1439 = vadd.f32 %v1438, 1e-05
        %v1440 = vrsqrt.pop %v1439
        %v1441 = vmul.f32 %v1433, %v1440
        %v1443 = vlaneseq
        %v1444 = vshrl.u32 %v1443, 7
        %v1445 = vsub.s32 0, %v1444
        %v1446 = vrot.slane %v1426, %v1445
        %v1448 = vmul.f32 %v1441, %v1446
        %v1450 = vlaneseq
        %v1451 = vshrl.u32 %v1450, 7
        %v1452 = vsub.s32 0, %v1451
        %v1453 = vrot.slane %v1427, %v1452
        %v1455 = vadd.f32 %v1448, %v1453
        %v1456 = vld [vmem:[%s9] sm:$0xff]
        %v1457 = vld [vmem:[%s9 + $0x8] sm:$0xff]
        %v1458 = vld [vmem:[%s9 + $0x10] sm:$0xff]
        %v1459 = vld [vmem:[%s9 + $0x18] sm:$0xff]
        %v1460 = vld [vmem:[%s10] sm:$0x1]
        %v1462 = vlaneseq
        %v1463 = vshrl.u32 %v1462, 7
        %v1464 = vsub.s32 0, %v1463
        %v1465 = vrot.slane %v1460, %v1464
        %v1468 = vsel %vm855, %v1455, 0
        %1470 = vmatprep.subr.mxu0 0.0
        %1471 = vmatpush1.msra.mxu0 %v1456
        %1472 = vmatprep.subr.mxu0 0.0
        %1473 = vmatpush1.msra.mxu0 %v1457
        %1474 = vmatprep.subr.mxu0 0.0
        %1475 = vmatpush1.msra.mxu0 %v1458
        %1476 = vmatprep.subr.mxu0 0.0
        %1477 = vmatpush1.msra.mxu0 %v1459
        %1478 = vmatprep.subr.mxu0 0.0
        %1479 = vmatpush1.msra.mxu0 0.0
        %1480 = vmatprep.subr.mxu0 0.0
        %1481 = vmatpush1.msra.mxu0 0.0
        %1482 = vmatprep.subr.mxu0 0.0
        %1483 = vmatpush1.msra.mxu0 0.0
        %1484 = vmatprep.subr.mxu0 0.0
        %1485 = vmatpush1.msra.mxu0 0.0
        %1486 = vmatprep.subr.mxu0 0.0
        %1487 = vmatpush1.msra.mxu0 0.0
        %1488 = vmatprep.subr.mxu0 0.0
        %1489 = vmatpush1.msra.mxu0 0.0
        %1490 = vmatprep.subr.mxu0 0.0
        %1491 = vmatpush1.msra.mxu0 0.0
        %1492 = vmatprep.subr.mxu0 0.0
        %1493 = vmatpush1.msra.mxu0 0.0
        %1494 = vmatprep.subr.mxu0 0.0
        %1495 = vmatpush1.msra.mxu0 0.0
        %1496 = vmatprep.subr.mxu0 0.0
        %1497 = vmatpush1.msra.mxu0 0.0
        %1498 = vmatprep.subr.mxu0 0.0
        %1499 = vmatpush1.msra.mxu0 0.0
        %1500 = vmatprep.subr.mxu0 0.0
        %1501 = vmatpush1.msra.mxu0 0.0
        %1502 = vmatprep.subr.mxu0 0.0
        %1503 = vmatpush1.msra.mxu0 0.0
        %1504 = vmatprep.subr.mxu0 0.0
        %1505 = vmatpush1.msra.mxu0 0.0
        %1506 = vmatprep.subr.mxu0 0.0
        %1507 = vmatpush1.msra.mxu0 0.0
        %1508 = vmatprep.subr.mxu0 0.0
        %1509 = vmatpush1.msra.mxu0 0.0
        %1510 = vmatprep.subr.mxu0 0.0
        %1511 = vmatpush1.msra.mxu0 0.0
        %1512 = vmatprep.subr.mxu0 0.0
        %1513 = vmatpush1.msra.mxu0 0.0
        %1514 = vmatprep.subr.mxu0 0.0
        %1515 = vmatpush1.msra.mxu0 0.0
        %1516 = vmatprep.subr.mxu0 0.0
        %1517 = vmatpush1.msra.mxu0 0.0
        %1518 = vmatprep.subr.mxu0 0.0
        %1519 = vmatpush1.msra.mxu0 0.0
        %1520 = vmatprep.subr.mxu0 0.0
        %1521 = vmatpush1.msra.mxu0 0.0
        %1522 = vmatprep.subr.mxu0 0.0
        %1523 = vmatpush1.msra.mxu0 0.0
        %1524 = vmatprep.subr.mxu0 0.0
        %1525 = vmatpush1.msra.mxu0 0.0
        %1526 = vmatprep.subr.mxu0 0.0
        %1527 = vmatpush1.msra.mxu0 0.0
        %1528 = vmatprep.subr.mxu0 0.0
        %1529 = vmatpush1.msra.mxu0 0.0
        %1530 = vmatprep.subr.mxu0 0.0
        %1531 = vmatpush1.msra.mxu0 0.0
        %1532 = vmatprep.subr.mxu0 0.0
        %1533 = vmatpush1.msra.mxu0 0.0
        %1534 = vmatprep.mubr.f32.mxu0 0.0
        %1535 = vmatmul.mubr.f32.gmra.mrb[0].mxu0 %v1468
        %v1536 = vpop.f32.mrb[0].mxu0
        %v1537 = vadd.f32 %v1465, %v1536
        %v1538 = vpop.f32.mrb[0].mxu0
        %1539 = vdwg.mxu0
        %v1540 = vmul.f32 %v1537, 0.5
        %v1541 = vmul.f32 %v1537, 0.044715
        %v1542 = vmul.f32 %v1541, %v1537
        %v1543 = vmul.f32 %v1542, %v1537
        %v1544 = vadd.f32 %v1537, %v1543
        %v1545 = vmul.f32 %v1544, 0.7978846
        %v1546 = vtanh.pop %v1545
        %v1547 = vadd.f32 %v1546, 1.0
        %v1548 = vmul.f32 %v1540, %v1547
        %v1549 = vld [vmem:[%s11] sm:$0xff]
        %v1550 = vld [vmem:[%s11 + $0x8] sm:$0xff]
        %v1551 = vld [vmem:[%s11 + $0x10] sm:$0xff]
        %v1552 = vld [vmem:[%s11 + $0x18] sm:$0xff]
        %v1553 = vld [vmem:[%s11 + $0x20] sm:$0xff]
        %v1554 = vld [vmem:[%s11 + $0x28] sm:$0xff]
        %v1555 = vld [vmem:[%s11 + $0x30] sm:$0xff]
        %v1556 = vld [vmem:[%s11 + $0x38] sm:$0xff]
        %v1557 = vld [vmem:[%s11 + $0x40] sm:$0xff]
        %v1558 = vld [vmem:[%s11 + $0x48] sm:$0xff]
        %v1559 = vld [vmem:[%s11 + $0x50] sm:$0xff]
        %v1560 = vld [vmem:[%s11 + $0x58] sm:$0xff]
        %v1561 = vld [vmem:[%s11 + $0x60] sm:$0xff]
        %v1562 = vld [vmem:[%s11 + $0x68] sm:$0xff]
        %v1563 = vld [vmem:[%s11 + $0x70] sm:$0xff]
        %v1564 = vld [vmem:[%s11 + $0x78] sm:$0xff]
        %1565 = vmatprep.subr.mxu0 0.0
        %1566 = vmatpush1.msra.mxu0 %v1549
        %1567 = vmatprep.subr.mxu0 0.0
        %1568 = vmatpush1.msra.mxu0 %v1550
        %1569 = vmatprep.subr.mxu0 0.0
        %1570 = vmatpush1.msra.mxu0 %v1551
        %1571 = vmatprep.subr.mxu0 0.0
        %1572 = vmatpush1.msra.mxu0 %v1552
        %1573 = vmatprep.subr.mxu0 0.0
        %1574 = vmatpush1.msra.mxu0 %v1553
        %1575 = vmatprep.subr.mxu0 0.0
        %1576 = vmatpush1.msra.mxu0 %v1554
        %1577 = vmatprep.subr.mxu0 0.0
        %1578 = vmatpush1.msra.mxu0 %v1555
        %1579 = vmatprep.subr.mxu0 0.0
        %1580 = vmatpush1.msra.mxu0 %v1556
        %1581 = vmatprep.subr.mxu0 0.0
        %1582 = vmatpush1.msra.mxu0 %v1557
        %1583 = vmatprep.subr.mxu0 0.0
        %1584 = vmatpush1.msra.mxu0 %v1558
        %1585 = vmatprep.subr.mxu0 0.0
        %1586 = vmatpush1.msra.mxu0 %v1559
        %1587 = vmatprep.subr.mxu0 0.0
        %1588 = vmatpush1.msra.mxu0 %v1560
        %1589 = vmatprep.subr.mxu0 0.0
        %1590 = vmatpush1.msra.mxu0 %v1561
        %1591 = vmatprep.subr.mxu0 0.0
        %1592 = vmatpush1.msra.mxu0 %v1562
        %1593 = vmatprep.subr.mxu0 0.0
        %1594 = vmatpush1.msra.mxu0 %v1563
        %1595 = vmatprep.subr.mxu0 0.0
        %1596 = vmatpush1.msra.mxu0 %v1564
        %1597 = vmatprep.subr.mxu0 0.0
        %1598 = vmatpush1.msra.mxu0 0.0
        %1599 = vmatprep.subr.mxu0 0.0
        %1600 = vmatpush1.msra.mxu0 0.0
        %1601 = vmatprep.subr.mxu0 0.0
        %1602 = vmatpush1.msra.mxu0 0.0
        %1603 = vmatprep.subr.mxu0 0.0
        %1604 = vmatpush1.msra.mxu0 0.0
        %1605 = vmatprep.subr.mxu0 0.0
        %1606 = vmatpush1.msra.mxu0 0.0
        %1607 = vmatprep.subr.mxu0 0.0
        %1608 = vmatpush1.msra.mxu0 0.0
        %1609 = vmatprep.subr.mxu0 0.0
        %1610 = vmatpush1.msra.mxu0 0.0
        %1611 = vmatprep.subr.mxu0 0.0
        %1612 = vmatpush1.msra.mxu0 0.0
        %1613 = vmatprep.subr.mxu0 0.0
        %1614 = vmatpush1.msra.mxu0 0.0
        %1615 = vmatprep.subr.mxu0 0.0
        %1616 = vmatpush1.msra.mxu0 0.0
        %1617 = vmatprep.subr.mxu0 0.0
        %1618 = vmatpush1.msra.mxu0 0.0
        %1619 = vmatprep.subr.mxu0 0.0
        %1620 = vmatpush1.msra.mxu0 0.0
        %1621 = vmatprep.subr.mxu0 0.0
        %1622 = vmatpush1.msra.mxu0 0.0
        %1623 = vmatprep.subr.mxu0 0.0
        %1624 = vmatpush1.msra.mxu0 0.0
        %1625 = vmatprep.subr.mxu0 0.0
        %1626 = vmatpush1.msra.mxu0 0.0
        %1627 = vmatprep.subr.mxu0 0.0
        %1628 = vmatpush1.msra.mxu0 0.0
        %1629 = vmatprep.mubr.f32.mxu0 0.0
        %1630 = vmatmul.mubr.f32.gmra.mrb[0].mxu0 %v1548
        %v1631 = vpop.f32.mrb[0].mxu0
        %v1632 = vadd.f32 0.0, %v1631
        %v1633 = vpop.f32.mrb[0].mxu0
        %1634 = vdwg.mxu0
        %v1635 = vadd.f32 %v1455, %v1632
        %v1636 = vld [vmem:[%s12] sm:$0x1]
        %v1638 = vlaneseq
        %v1639 = vshrl.u32 %v1638, 7
        %v1640 = vsub.s32 0, %v1639
        %v1641 = vrot.slane %v1636, %v1640
        %v1643 = vadd.f32 %v1635, %v1641
        %v1644 = vld [vmem:[%s13] sm:$0x1]
        %v1645 = vld [vmem:[%s14] sm:$0x1]
        %v1646 = vsel %vm855, %v1643, 0.0
        %1647 = vadd.xlane.f32.xlu0 %v1646
        %v1648 = vpop.xlane.xlu0 %1647
        %v1649 = vmul.f32 %v1648, %v1431
        %v1650 = vsub.f32 %v1643, %v1649
        %v1651 = vmul.f32 %v1650, %v1650
        %v1652 = vsel %vm855, %v1651, 0.0
        %1653 = vadd.xlane.f32.xlu0 %v1652
        %v1654 = vpop.xlane.xlu0 %1653
        %v1655 = vmul.f32 %v1654, %v1431
        %v1656 = vadd.f32 %v1655, 1e-05
        %v1657 = vrsqrt.pop %v1656
        %v1658 = vmul.f32 %v1650, %v1657
        %v1660 = vlaneseq
        %v1661 = vshrl.u32 %v1660, 7
        %v1662 = vsub.s32 0, %v1661
        %v1663 = vrot.slane %v1644, %v1662
        %v1665 = vmul.f32 %v1658, %v1663
        %v1667 = vlaneseq
        %v1668 = vshrl.u32 %v1667, 7
        %v1669 = vsub.s32 0, %v1668
        %v1670 = vrot.slane %v1645, %v1669
        %v1672 = vadd.f32 %v1665, %v1670
        %1673 = vst.msk [vmem:[%s588] sm:$0xff] %vm855, %v1672
        %s1674 = sand.u32 %s402, 1
        %s1675 = scalar_lea.sflag [#allocation3], %s1674
        %s1676 = sand.u32 %s402, 1
        %s1677 = smul.addr %s1676, 8
        %s1678 = scalar_lea.vmem [#allocation2], %s1677
        // Predicated region
        $region81: #{vrca_forward.3} parent=79 // pred_check
          %p1679 = pneg %p412
        $region82: #{vrca_forward.3} parent=79 // pred_check_branch
          %1681 = sbr.rel (%p1679) target = $region84
        $region83: #{vrca_forward.3} parent=79 // pred_region
          %s1683 = ssub.s32 128, 128
          %1684 = vsyncadd %s1675, %s1683
          %s1685 = sadd.s32 %s34, %s33
          %s1686 = smul.addr %s1685, 128
          %s1687 = scalar_lea.hbm %s15, %s1686
          %s1689 = sshll.u32 %s1678, 4
          %s1690 = int_to_ptr.vmem [resolvable:$true] %s1689
          %1692 = dma.vmem_to_hbm [thread:$0]  %s1690, 128, %s1687, %s1675
        $region84: #{vrca_forward.3} parent=79 // pred_fallthru
          _
      $region80: #{vrca_forward.3} parent=5 // pred_fallthru
        _
      %p1693 = scmp.le.s32.totalorder 2, %s24
      // Predicated region
      $region85: #{vrca_forward.3} parent=5 // pred_check
        %p1694 = pneg %p1693
      $region86: #{vrca_forward.3} parent=5 // pred_check_branch
        %1696 = sbr.rel (%p1694) target = $region88
      $region87: #{vrca_forward.3} parent=5 // pred_region
        %s1697 = ssub.s32 %s24, 2
        // Predicated region
        $region89: #{vrca_forward.3} parent=87 // pred_check
          %p1698 = pneg %p418
        $region90: #{vrca_forward.3} parent=87 // pred_check_branch
          %1700 = sbr.rel (%p1698) target = $region92
        $region91: #{vrca_forward.3} parent=87 // pred_region
          %s1701 = sand.u32 %s403, 1
          %s1702 = scalar_lea.sflag [#allocation3], %s1701
          %s1703 = sand.u32 %s403, 1
          %s1704 = smul.addr %s1703, 8
          %s1705 = scalar_lea.vmem [#allocation2], %s1704
          %1706 = dma.done %s1702, 128
        $region92: #{vrca_forward.3} parent=87 // pred_fallthru
          _
      $region88: #{vrca_forward.3} parent=5 // pred_fallthru
        _
    $region6: #{vrca_forward.3} parent=1 // loop_footer
      %s28 = sadd.s32 1, %s24
    $region7: #{vrca_forward.3} parent=1 // loop_footer_branch
      %23 = sbr.rel target = $region3
    $region8: #{vrca_forward.3} parent=1 // loop_exit
      _
    %1707 = vsyncpa [#allocation3], 1
    %s1708 = scalar_lea.sflag [#allocation3], 1
    %1709 = vsyncpa %s1708, 1

</llo_original>
